<compile_context>
chip_gen: v7x
topology: tpu7x:2x2x1
jax: 0.10.0
libtpu: 0.0.40
codegen_flags: <defaults>
</compile_context>

<pallas_src>
import functools

import jax
import jax.numpy as jnp
from jax.experimental import pallas as pl
from jax.experimental.pallas import tpu as pltpu  # noqa: F401  (TPU backend)


def _rnn_kernel(xflat_ref, wih0_ref, whh0_ref, b0_ref, w1_ref, b1_ref,
                wr2h_ref, br2h_ref, wh2o_ref, bh2o_ref, out_ref, *, T, B):
    """2-layer LSTM recurrence + FC head.

    xflat_ref : (T*B, input_size) bf16
    wih0_ref  : (input_size, 4H)  bf16
    whh0_ref  : (H, 4H)           bf16
    b0_ref    : (1, 4H)           f32   (b_ih0 + b_hh0)
    w1_ref    : (2H, 4H)          bf16  ([wih1; whh1] fused)
    b1_ref    : (1, 4H)           f32   (b_ih1 + b_hh1)
    wr2h_ref  : (H, hidden2)      f32
    br2h_ref  : (1, hidden2)      f32
    wh2o_ref  : (hidden2, O)      f32
    bh2o_ref  : (1, O)            f32
    out_ref   : (B, O)            f32
    """
    H = whh0_ref.shape[0]
    G = 4 * H
    bf = jnp.bfloat16

    # ---- Hoisted layer-0 input projection for ALL timesteps (one MXU op),
    #      with bias b0 folded in.  Shape (T*B, 4H), f32 accumulation.
    xp = jnp.dot(xflat_ref[...], wih0_ref[...],
                 preferred_element_type=jnp.float32) + b0_ref[...]

    whh0 = whh0_ref[...]                                  # (H, 4H)  bf16
    w1 = w1_ref[...]                                      # (2H, 4H) bf16
    b1b = jnp.broadcast_to(b1_ref[...], (B, G))           # hoisted bias bcast

    def gate_act(gates):
        # Full-width EUP ops on the (B, 4H) row, then static lane slices.
        sig = jax.nn.sigmoid(gates)
        th = jnp.tanh(gates)
        i = sig[:, 0 * H:1 * H]
        f = sig[:, 1 * H:2 * H]
        g = th[:, 2 * H:3 * H]
        o = sig[:, 3 * H:4 * H]
        return i, f, g, o

    h1 = jnp.zeros((B, H), jnp.float32)
    c1 = jnp.zeros((B, H), jnp.float32)
    h2 = jnp.zeros((B, H), jnp.float32)
    c2 = jnp.zeros((B, H), jnp.float32)

    # ---- Fully unrolled time loop (T is static and small).  Layer-0 of step
    #      t+1 and layer-1 of step t are independent; unrolling lets the
    #      scheduler overlap their MXU/EUP work.
    for t in range(T):
        x_t = xp[t * B:(t + 1) * B, :]                    # (B, 4H), static slice
        if t == 0:
            gates0 = x_t                                  # h1 == 0: skip matmul
        else:
            gates0 = x_t + jnp.dot(h1.astype(bf), whh0,
                                   preferred_element_type=jnp.float32)
        i0, f0, g0, o0 = gate_act(gates0)
        c1 = f0 * c1 + i0 * g0
        h1 = o0 * jnp.tanh(c1)

        # Layer 1: single fused matmul over K = 2H.
        lhs1 = jnp.concatenate([h1, h2], axis=-1).astype(bf)   # (B, 2H)
        gates1 = jnp.dot(lhs1, w1, preferred_element_type=jnp.float32) + b1b
        i1, f1, g1, o1 = gate_act(gates1)
        c2 = f1 * c2 + i1 * g1
        h2 = o1 * jnp.tanh(c2)

    # ---- FC head: output = h2o(relu(r2h(h2_last)))  (kept in f32; tiny)
    fc1 = jnp.maximum(
        jnp.dot(h2, wr2h_ref[...], preferred_element_type=jnp.float32)
        + br2h_ref[...], 0.0)
    out_ref[...] = (jnp.dot(fc1, wh2o_ref[...], preferred_element_type=jnp.float32)
                    + bh2o_ref[...])


def rnn_forward(x, params):
    """x: (T, B, input_size) float32.  Returns (B, output_size) float32."""
    (wih0, whh0, b0, wih1, whh1, b1, wr2h, br2h, wh2o, bh2o) = params
    T, B, I = x.shape
    O = wh2o.shape[1]
    bf = jnp.bfloat16

    # Wrapper-side layout prep (cheap, done once): flatten time*batch for the
    # hoisted projection, fuse layer-1 weights, cast matmul operands to bf16.
    x_flat = x.reshape(T * B, I).astype(bf)
    w1 = jnp.concatenate([wih1, whh1], axis=0)            # (2H, 4H)

    args = (x_flat, wih0.astype(bf), whh0.astype(bf), b0,
            w1.astype(bf), b1, wr2h, br2h, wh2o, bh2o)

    def full_spec(arr):
        nd = arr.ndim
        return pl.BlockSpec(arr.shape, lambda *_, n=nd: (0,) * n)

    kernel = functools.partial(_rnn_kernel, T=T, B=B)

    return pl.pallas_call(
        kernel,
        out_shape=jax.ShapeDtypeStruct((B, O), jnp.float32),
        in_specs=[full_spec(a) for a in args],
        out_specs=pl.BlockSpec((B, O), lambda: (0, 0)),
    )(*args)


def rnn_forward_ref(x, params):
    """Pure-JAX f32 reference (PyTorch-equivalent math) for correctness."""
    (wih0, whh0, b0, wih1, whh1, b1, wr2h, br2h, wh2o, bh2o) = params
    T, B, _ = x.shape
    H = whh0.shape[0]

    def cell(x_t, h, c, wih, whh, b):
        g = x_t @ wih + h @ whh + b
        i = jax.nn.sigmoid(g[:, 0 * H:1 * H])
        f = jax.nn.sigmoid(g[:, 1 * H:2 * H])
        gg = jnp.tanh(g[:, 2 * H:3 * H])
        o = jax.nn.sigmoid(g[:, 3 * H:4 * H])
        c = f * c + i * gg
        return o * jnp.tanh(c), c

    h1 = c1 = h2 = c2 = jnp.zeros((B, H), jnp.float32)
    for t in range(T):
        h1, c1 = cell(x[t], h1, c1, wih0, whh0, b0)
        h2, c2 = cell(h1, h2, c2, wih1, whh1, b1)
    fc1 = jnp.maximum(h2 @ wr2h + br2h, 0.0)
    return fc1 @ wh2o + bh2o


def init_params(key, input_size, hidden1, hidden2, output_size):
    ks = jax.random.split(key, 12)
    s = 0.1

    def rnd(k, shape):
        return (s * jax.random.normal(k, shape)).astype(jnp.float32)

    # LSTM layer 0 (PyTorch stores (4H, in); we keep transposed (in, 4H)).
    wih0 = rnd(ks[0], (input_size, 4 * hidden1))
    whh0 = rnd(ks[1], (hidden1, 4 * hidden1))
    b0 = rnd(ks[2], (1, 4 * hidden1))          # b_ih + b_hh fused
    # LSTM layer 1
    wih1 = rnd(ks[3], (hidden1, 4 * hidden1))
    whh1 = rnd(ks[4], (hidden1, 4 * hidden1))
    b1 = rnd(ks[5], (1, 4 * hidden1))
    # r2h: Linear(hidden1 -> hidden2)
    wr2h = rnd(ks[6], (hidden1, hidden2))
    br2h = rnd(ks[7], (1, hidden2))
    # h2o: Linear(hidden2 -> output_size)
    wh2o = rnd(ks[8], (hidden2, output_size))
    bh2o = rnd(ks[9], (1, output_size))
    return (wih0, whh0, b0, wih1, whh1, b1, wr2h, br2h, wh2o, bh2o)


if __name__ == "__main__":
    T, B = 8, 2
    input_size, hidden1, hidden2, output_size = 8, 32, 32, 4

    key = jax.random.PRNGKey(0)
    k_x, k_p = jax.random.split(key)
    x = jax.random.normal(k_x, (T, B, input_size), dtype=jnp.float32)
    params = init_params(k_p, input_size, hidden1, hidden2, output_size)

    out = rnn_forward(x, params)
    out = jax.block_until_ready(out)

    ref = rnn_forward_ref(x, params)
    assert out.shape == (B, output_size)
    # bf16 matmul operands in the kernel -> allow ~1e-2 level deviation vs f32 ref.
    assert jnp.allclose(out, ref, atol=2e-2, rtol=2e-2), "mismatch vs reference"

    print("KERNEL_OK")
</pallas_src>

<mosaic_0001>
module attributes {stable_mosaic.version = 11 : i64} {
  func.func @_rnn_kernel(%arg0: memref<16x8xbf16, #tpu.memory_space<vmem>>, %arg1: memref<8x128xbf16, #tpu.memory_space<vmem>>, %arg2: memref<32x128xbf16, #tpu.memory_space<vmem>>, %arg3: memref<1x128xf32, #tpu.memory_space<vmem>>, %arg4: memref<64x128xbf16, #tpu.memory_space<vmem>>, %arg5: memref<1x128xf32, #tpu.memory_space<vmem>>, %arg6: memref<32x32xf32, #tpu.memory_space<vmem>>, %arg7: memref<1x32xf32, #tpu.memory_space<vmem>>, %arg8: memref<32x4xf32, #tpu.memory_space<vmem>>, %arg9: memref<1x4xf32, #tpu.memory_space<vmem>>, %arg10: memref<2x4xf32, #tpu.memory_space<vmem>>) attributes {dimension_semantics = [], scalar_prefetch = 0 : i64, scratch_operands = 0 : i64, tpu.core_type = #tpu.core_type<tc>} {
    %c0 = arith.constant 0 : index
    %c0_0 = arith.constant 0 : index
    %0 = vector.load %arg0[%c0, %c0_0] : memref<16x8xbf16, #tpu.memory_space<vmem>>, vector<16x8xbf16>
    %c0_1 = arith.constant 0 : index
    %c0_2 = arith.constant 0 : index
    %1 = vector.load %arg1[%c0_1, %c0_2] : memref<8x128xbf16, #tpu.memory_space<vmem>>, vector<8x128xbf16>
    %cst = arith.constant dense<0.000000e+00> : vector<16x128xf32>
    %2 = tpu.matmul %0, %1, %cst {dimension_numbers = #tpu.dot_dimension_numbers<[1], [0], [0], [1], [0, 0, 1, 1], [], []>} : vector<16x8xbf16>, vector<8x128xbf16>, vector<16x128xf32> -> vector<16x128xf32>
    %c0_3 = arith.constant 0 : index
    %c0_4 = arith.constant 0 : index
    %3 = vector.load %arg3[%c0_3, %c0_4] : memref<1x128xf32, #tpu.memory_space<vmem>>, vector<1x128xf32>
    %4 = vector.broadcast %3 : vector<1x128xf32> to vector<16x128xf32>
    %5 = arith.addf %2, %4 : vector<16x128xf32>
    %c0_5 = arith.constant 0 : index
    %c0_6 = arith.constant 0 : index
    %6 = vector.load %arg2[%c0_5, %c0_6] : memref<32x128xbf16, #tpu.memory_space<vmem>>, vector<32x128xbf16>
    %c0_7 = arith.constant 0 : index
    %c0_8 = arith.constant 0 : index
    %7 = vector.load %arg4[%c0_7, %c0_8] : memref<64x128xbf16, #tpu.memory_space<vmem>>, vector<64x128xbf16>
    %c0_9 = arith.constant 0 : index
    %c0_10 = arith.constant 0 : index
    %8 = vector.load %arg5[%c0_9, %c0_10] : memref<1x128xf32, #tpu.memory_space<vmem>>, vector<1x128xf32>
    %9 = vector.shape_cast %8 : vector<1x128xf32> to vector<1x128xf32>
    %10 = vector.broadcast %9 : vector<1x128xf32> to vector<2x128xf32>
    %cst_11 = arith.constant 0.000000e+00 : f32
    %11 = vector.broadcast %cst_11 : f32 to vector<2x32xf32>
    %cst_12 = arith.constant 0.000000e+00 : f32
    %12 = vector.broadcast %cst_12 : f32 to vector<2x32xf32>
    %cst_13 = arith.constant 0.000000e+00 : f32
    %13 = vector.broadcast %cst_13 : f32 to vector<2x32xf32>
    %14 = vector.extract_strided_slice %5 {offsets = [0, 0], sizes = [2, 128], strides = [1, 1]} : vector<16x128xf32> to vector<2x128xf32>
    %15 = arith.negf %14 : vector<2x128xf32>
    %16 = math.exp %15 : vector<2x128xf32>
    %cst_14 = arith.constant 1.000000e+00 : f32
    %17 = vector.broadcast %cst_14 : f32 to vector<2x128xf32>
    %18 = arith.addf %17, %16 : vector<2x128xf32>
    %19 = arith.divf %17, %18 : vector<2x128xf32>
    %20 = math.tanh %14 : vector<2x128xf32>
    %21 = vector.extract_strided_slice %19 {offsets = [0, 0], sizes = [2, 32], strides = [1, 1]} : vector<2x128xf32> to vector<2x32xf32>
    %22 = vector.extract_strided_slice %19 {offsets = [0, 32], sizes = [2, 32], strides = [1, 1]} : vector<2x128xf32> to vector<2x32xf32>
    %23 = vector.extract_strided_slice %20 {offsets = [0, 64], sizes = [2, 32], strides = [1, 1]} : vector<2x128xf32> to vector<2x32xf32>
    %24 = vector.extract_strided_slice %19 {offsets = [0, 96], sizes = [2, 32], strides = [1, 1]} : vector<2x128xf32> to vector<2x32xf32>
    %25 = arith.mulf %22, %11 : vector<2x32xf32>
    %26 = arith.mulf %21, %23 : vector<2x32xf32>
    %27 = arith.addf %25, %26 : vector<2x32xf32>
    %28 = math.tanh %27 : vector<2x32xf32>
    %29 = arith.mulf %24, %28 : vector<2x32xf32>
    %30 = tpu.concatenate %29, %12 in 1 : vector<2x32xf32>, vector<2x32xf32> -> vector<2x64xf32>
    %31 = arith.truncf %30 : vector<2x64xf32> to vector<2x64xbf16>
    %cst_15 = arith.constant dense<0.000000e+00> : vector<2x128xf32>
    %32 = tpu.matmul %31, %7, %cst_15 {dimension_numbers = #tpu.dot_dimension_numbers<[1], [0], [0], [1], [0, 0, 1, 1], [], []>} : vector<2x64xbf16>, vector<64x128xbf16>, vector<2x128xf32> -> vector<2x128xf32>
    %33 = arith.addf %32, %10 : vector<2x128xf32>
    %34 = arith.negf %33 : vector<2x128xf32>
    %35 = math.exp %34 : vector<2x128xf32>
    %cst_16 = arith.constant 1.000000e+00 : f32
    %36 = vector.broadcast %cst_16 : f32 to vector<2x128xf32>
    %37 = arith.addf %36, %35 : vector<2x128xf32>
    %38 = arith.divf %36, %37 : vector<2x128xf32>
    %39 = math.tanh %33 : vector<2x128xf32>
    %40 = vector.extract_strided_slice %38 {offsets = [0, 0], sizes = [2, 32], strides = [1, 1]} : vector<2x128xf32> to vector<2x32xf32>
    %41 = vector.extract_strided_slice %38 {offsets = [0, 32], sizes = [2, 32], strides = [1, 1]} : vector<2x128xf32> to vector<2x32xf32>
    %42 = vector.extract_strided_slice %39 {offsets = [0, 64], sizes = [2, 32], strides = [1, 1]} : vector<2x128xf32> to vector<2x32xf32>
    %43 = vector.extract_strided_slice %38 {offsets = [0, 96], sizes = [2, 32], strides = [1, 1]} : vector<2x128xf32> to vector<2x32xf32>
    %44 = arith.mulf %41, %13 : vector<2x32xf32>
    %45 = arith.mulf %40, %42 : vector<2x32xf32>
    %46 = arith.addf %44, %45 : vector<2x32xf32>
    %47 = math.tanh %46 : vector<2x32xf32>
    %48 = arith.mulf %43, %47 : vector<2x32xf32>
    %49 = vector.extract_strided_slice %5 {offsets = [2, 0], sizes = [2, 128], strides = [1, 1]} : vector<16x128xf32> to vector<2x128xf32>
    %50 = arith.truncf %29 : vector<2x32xf32> to vector<2x32xbf16>
    %cst_17 = arith.constant dense<0.000000e+00> : vector<2x128xf32>
    %51 = tpu.matmul %50, %6, %cst_17 {dimension_numbers = #tpu.dot_dimension_numbers<[1], [0], [0], [1], [0, 0, 1, 1], [], []>} : vector<2x32xbf16>, vector<32x128xbf16>, vector<2x128xf32> -> vector<2x128xf32>
    %52 = arith.addf %49, %51 : vector<2x128xf32>
    %53 = arith.negf %52 : vector<2x128xf32>
    %54 = math.exp %53 : vector<2x128xf32>
    %cst_18 = arith.constant 1.000000e+00 : f32
    %55 = vector.broadcast %cst_18 : f32 to vector<2x128xf32>
    %56 = arith.addf %55, %54 : vector<2x128xf32>
    %57 = arith.divf %55, %56 : vector<2x128xf32>
    %58 = math.tanh %52 : vector<2x128xf32>
    %59 = vector.extract_strided_slice %57 {offsets = [0, 0], sizes = [2, 32], strides = [1, 1]} : vector<2x128xf32> to vector<2x32xf32>
    %60 = vector.extract_strided_slice %57 {offsets = [0, 32], sizes = [2, 32], strides = [1, 1]} : vector<2x128xf32> to vector<2x32xf32>
    %61 = vector.extract_strided_slice %58 {offsets = [0, 64], sizes = [2, 32], strides = [1, 1]} : vector<2x128xf32> to vector<2x32xf32>
    %62 = vector.extract_strided_slice %57 {offsets = [0, 96], sizes = [2, 32], strides = [1, 1]} : vector<2x128xf32> to vector<2x32xf32>
    %63 = arith.mulf %60, %27 : vector<2x32xf32>
    %64 = arith.mulf %59, %61 : vector<2x32xf32>
    %65 = arith.addf %63, %64 : vector<2x32xf32>
    %66 = math.tanh %65 : vector<2x32xf32>
    %67 = arith.mulf %62, %66 : vector<2x32xf32>
    %68 = tpu.concatenate %67, %48 in 1 : vector<2x32xf32>, vector<2x32xf32> -> vector<2x64xf32>
    %69 = arith.truncf %68 : vector<2x64xf32> to vector<2x64xbf16>
    %cst_19 = arith.constant dense<0.000000e+00> : vector<2x128xf32>
    %70 = tpu.matmul %69, %7, %cst_19 {dimension_numbers = #tpu.dot_dimension_numbers<[1], [0], [0], [1], [0, 0, 1, 1], [], []>} : vector<2x64xbf16>, vector<64x128xbf16>, vector<2x128xf32> -> vector<2x128xf32>
    %71 = arith.addf %70, %10 : vector<2x128xf32>
    %72 = arith.negf %71 : vector<2x128xf32>
    %73 = math.exp %72 : vector<2x128xf32>
    %cst_20 = arith.constant 1.000000e+00 : f32
    %74 = vector.broadcast %cst_20 : f32 to vector<2x128xf32>
    %75 = arith.addf %74, %73 : vector<2x128xf32>
    %76 = arith.divf %74, %75 : vector<2x128xf32>
    %77 = math.tanh %71 : vector<2x128xf32>
    %78 = vector.extract_strided_slice %76 {offsets = [0, 0], sizes = [2, 32], strides = [1, 1]} : vector<2x128xf32> to vector<2x32xf32>
    %79 = vector.extract_strided_slice %76 {offsets = [0, 32], sizes = [2, 32], strides = [1, 1]} : vector<2x128xf32> to vector<2x32xf32>
    %80 = vector.extract_strided_slice %77 {offsets = [0, 64], sizes = [2, 32], strides = [1, 1]} : vector<2x128xf32> to vector<2x32xf32>
    %81 = vector.extract_strided_slice %76 {offsets = [0, 96], sizes = [2, 32], strides = [1, 1]} : vector<2x128xf32> to vector<2x32xf32>
    %82 = arith.mulf %79, %46 : vector<2x32xf32>
    %83 = arith.mulf %78, %80 : vector<2x32xf32>
    %84 = arith.addf %82, %83 : vector<2x32xf32>
    %85 = math.tanh %84 : vector<2x32xf32>
    %86 = arith.mulf %81, %85 : vector<2x32xf32>
    %87 = vector.extract_strided_slice %5 {offsets = [4, 0], sizes = [2, 128], strides = [1, 1]} : vector<16x128xf32> to vector<2x128xf32>
    %88 = arith.truncf %67 : vector<2x32xf32> to vector<2x32xbf16>
    %cst_21 = arith.constant dense<0.000000e+00> : vector<2x128xf32>
    %89 = tpu.matmul %88, %6, %cst_21 {dimension_numbers = #tpu.dot_dimension_numbers<[1], [0], [0], [1], [0, 0, 1, 1], [], []>} : vector<2x32xbf16>, vector<32x128xbf16>, vector<2x128xf32> -> vector<2x128xf32>
    %90 = arith.addf %87, %89 : vector<2x128xf32>
    %91 = arith.negf %90 : vector<2x128xf32>
    %92 = math.exp %91 : vector<2x128xf32>
    %cst_22 = arith.constant 1.000000e+00 : f32
    %93 = vector.broadcast %cst_22 : f32 to vector<2x128xf32>
    %94 = arith.addf %93, %92 : vector<2x128xf32>
    %95 = arith.divf %93, %94 : vector<2x128xf32>
    %96 = math.tanh %90 : vector<2x128xf32>
    %97 = vector.extract_strided_slice %95 {offsets = [0, 0], sizes = [2, 32], strides = [1, 1]} : vector<2x128xf32> to vector<2x32xf32>
    %98 = vector.extract_strided_slice %95 {offsets = [0, 32], sizes = [2, 32], strides = [1, 1]} : vector<2x128xf32> to vector<2x32xf32>
    %99 = vector.extract_strided_slice %96 {offsets = [0, 64], sizes = [2, 32], strides = [1, 1]} : vector<2x128xf32> to vector<2x32xf32>
    %100 = vector.extract_strided_slice %95 {offsets = [0, 96], sizes = [2, 32], strides = [1, 1]} : vector<2x128xf32> to vector<2x32xf32>
    %101 = arith.mulf %98, %65 : vector<2x32xf32>
    %102 = arith.mulf %97, %99 : vector<2x32xf32>
    %103 = arith.addf %101, %102 : vector<2x32xf32>
    %104 = math.tanh %103 : vector<2x32xf32>
    %105 = arith.mulf %100, %104 : vector<2x32xf32>
    %106 = tpu.concatenate %105, %86 in 1 : vector<2x32xf32>, vector<2x32xf32> -> vector<2x64xf32>
    %107 = arith.truncf %106 : vector<2x64xf32> to vector<2x64xbf16>
    %cst_23 = arith.constant dense<0.000000e+00> : vector<2x128xf32>
    %108 = tpu.matmul %107, %7, %cst_23 {dimension_numbers = #tpu.dot_dimension_numbers<[1], [0], [0], [1], [0, 0, 1, 1], [], []>} : vector<2x64xbf16>, vector<64x128xbf16>, vector<2x128xf32> -> vector<2x128xf32>
    %109 = arith.addf %108, %10 : vector<2x128xf32>
    %110 = arith.negf %109 : vector<2x128xf32>
    %111 = math.exp %110 : vector<2x128xf32>
    %cst_24 = arith.constant 1.000000e+00 : f32
    %112 = vector.broadcast %cst_24 : f32 to vector<2x128xf32>
    %113 = arith.addf %112, %111 : vector<2x128xf32>
    %114 = arith.divf %112, %113 : vector<2x128xf32>
    %115 = math.tanh %109 : vector<2x128xf32>
    %116 = vector.extract_strided_slice %114 {offsets = [0, 0], sizes = [2, 32], strides = [1, 1]} : vector<2x128xf32> to vector<2x32xf32>
    %117 = vector.extract_strided_slice %114 {offsets = [0, 32], sizes = [2, 32], strides = [1, 1]} : vector<2x128xf32> to vector<2x32xf32>
    %118 = vector.extract_strided_slice %115 {offsets = [0, 64], sizes = [2, 32], strides = [1, 1]} : vector<2x128xf32> to vector<2x32xf32>
    %119 = vector.extract_strided_slice %114 {offsets = [0, 96], sizes = [2, 32], strides = [1, 1]} : vector<2x128xf32> to vector<2x32xf32>
    %120 = arith.mulf %117, %84 : vector<2x32xf32>
    %121 = arith.mulf %116, %118 : vector<2x32xf32>
    %122 = arith.addf %120, %121 : vector<2x32xf32>
    %123 = math.tanh %122 : vector<2x32xf32>
    %124 = arith.mulf %119, %123 : vector<2x32xf32>
    %125 = vector.extract_strided_slice %5 {offsets = [6, 0], sizes = [2, 128], strides = [1, 1]} : vector<16x128xf32> to vector<2x128xf32>
    %126 = arith.truncf %105 : vector<2x32xf32> to vector<2x32xbf16>
    %cst_25 = arith.constant dense<0.000000e+00> : vector<2x128xf32>
    %127 = tpu.matmul %126, %6, %cst_25 {dimension_numbers = #tpu.dot_dimension_numbers<[1], [0], [0], [1], [0, 0, 1, 1], [], []>} : vector<2x32xbf16>, vector<32x128xbf16>, vector<2x128xf32> -> vector<2x128xf32>
    %128 = arith.addf %125, %127 : vector<2x128xf32>
    %129 = arith.negf %128 : vector<2x128xf32>
    %130 = math.exp %129 : vector<2x128xf32>
    %cst_26 = arith.constant 1.000000e+00 : f32
    %131 = vector.broadcast %cst_26 : f32 to vector<2x128xf32>
    %132 = arith.addf %131, %130 : vector<2x128xf32>
    %133 = arith.divf %131, %132 : vector<2x128xf32>
    %134 = math.tanh %128 : vector<2x128xf32>
    %135 = vector.extract_strided_slice %133 {offsets = [0, 0], sizes = [2, 32], strides = [1, 1]} : vector<2x128xf32> to vector<2x32xf32>
    %136 = vector.extract_strided_slice %133 {offsets = [0, 32], sizes = [2, 32], strides = [1, 1]} : vector<2x128xf32> to vector<2x32xf32>
    %137 = vector.extract_strided_slice %134 {offsets = [0, 64], sizes = [2, 32], strides = [1, 1]} : vector<2x128xf32> to vector<2x32xf32>
    %138 = vector.extract_strided_slice %133 {offsets = [0, 96], sizes = [2, 32], strides = [1, 1]} : vector<2x128xf32> to vector<2x32xf32>
    %139 = arith.mulf %136, %103 : vector<2x32xf32>
    %140 = arith.mulf %135, %137 : vector<2x32xf32>
    %141 = arith.addf %139, %140 : vector<2x32xf32>
    %142 = math.tanh %141 : vector<2x32xf32>
    %143 = arith.mulf %138, %142 : vector<2x32xf32>
    %144 = tpu.concatenate %143, %124 in 1 : vector<2x32xf32>, vector<2x32xf32> -> vector<2x64xf32>
    %145 = arith.truncf %144 : vector<2x64xf32> to vector<2x64xbf16>
    %cst_27 = arith.constant dense<0.000000e+00> : vector<2x128xf32>
    %146 = tpu.matmul %145, %7, %cst_27 {dimension_numbers = #tpu.dot_dimension_numbers<[1], [0], [0], [1], [0, 0, 1, 1], [], []>} : vector<2x64xbf16>, vector<64x128xbf16>, vector<2x128xf32> -> vector<2x128xf32>
    %147 = arith.addf %146, %10 : vector<2x128xf32>
    %148 = arith.negf %147 : vector<2x128xf32>
    %149 = math.exp %148 : vector<2x128xf32>
    %cst_28 = arith.constant 1.000000e+00 : f32
    %150 = vector.broadcast %cst_28 : f32 to vector<2x128xf32>
    %151 = arith.addf %150, %149 : vector<2x128xf32>
    %152 = arith.divf %150, %151 : vector<2x128xf32>
    %153 = math.tanh %147 : vector<2x128xf32>
    %154 = vector.extract_strided_slice %152 {offsets = [0, 0], sizes = [2, 32], strides = [1, 1]} : vector<2x128xf32> to vector<2x32xf32>
    %155 = vector.extract_strided_slice %152 {offsets = [0, 32], sizes = [2, 32], strides = [1, 1]} : vector<2x128xf32> to vector<2x32xf32>
    %156 = vector.extract_strided_slice %153 {offsets = [0, 64], sizes = [2, 32], strides = [1, 1]} : vector<2x128xf32> to vector<2x32xf32>
    %157 = vector.extract_strided_slice %152 {offsets = [0, 96], sizes = [2, 32], strides = [1, 1]} : vector<2x128xf32> to vector<2x32xf32>
    %158 = arith.mulf %155, %122 : vector<2x32xf32>
    %159 = arith.mulf %154, %156 : vector<2x32xf32>
    %160 = arith.addf %158, %159 : vector<2x32xf32>
    %161 = math.tanh %160 : vector<2x32xf32>
    %162 = arith.mulf %157, %161 : vector<2x32xf32>
    %163 = vector.extract_strided_slice %5 {offsets = [8, 0], sizes = [2, 128], strides = [1, 1]} : vector<16x128xf32> to vector<2x128xf32>
    %164 = arith.truncf %143 : vector<2x32xf32> to vector<2x32xbf16>
    %cst_29 = arith.constant dense<0.000000e+00> : vector<2x128xf32>
    %165 = tpu.matmul %164, %6, %cst_29 {dimension_numbers = #tpu.dot_dimension_numbers<[1], [0], [0], [1], [0, 0, 1, 1], [], []>} : vector<2x32xbf16>, vector<32x128xbf16>, vector<2x128xf32> -> vector<2x128xf32>
    %166 = arith.addf %163, %165 : vector<2x128xf32>
    %167 = arith.negf %166 : vector<2x128xf32>
    %168 = math.exp %167 : vector<2x128xf32>
    %cst_30 = arith.constant 1.000000e+00 : f32
    %169 = vector.broadcast %cst_30 : f32 to vector<2x128xf32>
    %170 = arith.addf %169, %168 : vector<2x128xf32>
    %171 = arith.divf %169, %170 : vector<2x128xf32>
    %172 = math.tanh %166 : vector<2x128xf32>
    %173 = vector.extract_strided_slice %171 {offsets = [0, 0], sizes = [2, 32], strides = [1, 1]} : vector<2x128xf32> to vector<2x32xf32>
    %174 = vector.extract_strided_slice %171 {offsets = [0, 32], sizes = [2, 32], strides = [1, 1]} : vector<2x128xf32> to vector<2x32xf32>
    %175 = vector.extract_strided_slice %172 {offsets = [0, 64], sizes = [2, 32], strides = [1, 1]} : vector<2x128xf32> to vector<2x32xf32>
    %176 = vector.extract_strided_slice %171 {offsets = [0, 96], sizes = [2, 32], strides = [1, 1]} : vector<2x128xf32> to vector<2x32xf32>
    %177 = arith.mulf %174, %141 : vector<2x32xf32>
    %178 = arith.mulf %173, %175 : vector<2x32xf32>
    %179 = arith.addf %177, %178 : vector<2x32xf32>
    %180 = math.tanh %179 : vector<2x32xf32>
    %181 = arith.mulf %176, %180 : vector<2x32xf32>
    %182 = tpu.concatenate %181, %162 in 1 : vector<2x32xf32>, vector<2x32xf32> -> vector<2x64xf32>
    %183 = arith.truncf %182 : vector<2x64xf32> to vector<2x64xbf16>
    %cst_31 = arith.constant dense<0.000000e+00> : vector<2x128xf32>
    %184 = tpu.matmul %183, %7, %cst_31 {dimension_numbers = #tpu.dot_dimension_numbers<[1], [0], [0], [1], [0, 0, 1, 1], [], []>} : vector<2x64xbf16>, vector<64x128xbf16>, vector<2x128xf32> -> vector<2x128xf32>
    %185 = arith.addf %184, %10 : vector<2x128xf32>
    %186 = arith.negf %185 : vector<2x128xf32>
    %187 = math.exp %186 : vector<2x128xf32>
    %cst_32 = arith.constant 1.000000e+00 : f32
    %188 = vector.broadcast %cst_32 : f32 to vector<2x128xf32>
    %189 = arith.addf %188, %187 : vector<2x128xf32>
    %190 = arith.divf %188, %189 : vector<2x128xf32>
    %191 = math.tanh %185 : vector<2x128xf32>
    %192 = vector.extract_strided_slice %190 {offsets = [0, 0], sizes = [2, 32], strides = [1, 1]} : vector<2x128xf32> to vector<2x32xf32>
    %193 = vector.extract_strided_slice %190 {offsets = [0, 32], sizes = [2, 32], strides = [1, 1]} : vector<2x128xf32> to vector<2x32xf32>
    %194 = vector.extract_strided_slice %191 {offsets = [0, 64], sizes = [2, 32], strides = [1, 1]} : vector<2x128xf32> to vector<2x32xf32>
    %195 = vector.extract_strided_slice %190 {offsets = [0, 96], sizes = [2, 32], strides = [1, 1]} : vector<2x128xf32> to vector<2x32xf32>
    %196 = arith.mulf %193, %160 : vector<2x32xf32>
    %197 = arith.mulf %192, %194 : vector<2x32xf32>
    %198 = arith.addf %196, %197 : vector<2x32xf32>
    %199 = math.tanh %198 : vector<2x32xf32>
    %200 = arith.mulf %195, %199 : vector<2x32xf32>
    %201 = vector.extract_strided_slice %5 {offsets = [10, 0], sizes = [2, 128], strides = [1, 1]} : vector<16x128xf32> to vector<2x128xf32>
    %202 = arith.truncf %181 : vector<2x32xf32> to vector<2x32xbf16>
    %cst_33 = arith.constant dense<0.000000e+00> : vector<2x128xf32>
    %203 = tpu.matmul %202, %6, %cst_33 {dimension_numbers = #tpu.dot_dimension_numbers<[1], [0], [0], [1], [0, 0, 1, 1], [], []>} : vector<2x32xbf16>, vector<32x128xbf16>, vector<2x128xf32> -> vector<2x128xf32>
    %204 = arith.addf %201, %203 : vector<2x128xf32>
    %205 = arith.negf %204 : vector<2x128xf32>
    %206 = math.exp %205 : vector<2x128xf32>
    %cst_34 = arith.constant 1.000000e+00 : f32
    %207 = vector.broadcast %cst_34 : f32 to vector<2x128xf32>
    %208 = arith.addf %207, %206 : vector<2x128xf32>
    %209 = arith.divf %207, %208 : vector<2x128xf32>
    %210 = math.tanh %204 : vector<2x128xf32>
    %211 = vector.extract_strided_slice %209 {offsets = [0, 0], sizes = [2, 32], strides = [1, 1]} : vector<2x128xf32> to vector<2x32xf32>
    %212 = vector.extract_strided_slice %209 {offsets = [0, 32], sizes = [2, 32], strides = [1, 1]} : vector<2x128xf32> to vector<2x32xf32>
    %213 = vector.extract_strided_slice %210 {offsets = [0, 64], sizes = [2, 32], strides = [1, 1]} : vector<2x128xf32> to vector<2x32xf32>
    %214 = vector.extract_strided_slice %209 {offsets = [0, 96], sizes = [2, 32], strides = [1, 1]} : vector<2x128xf32> to vector<2x32xf32>
    %215 = arith.mulf %212, %179 : vector<2x32xf32>
    %216 = arith.mulf %211, %213 : vector<2x32xf32>
    %217 = arith.addf %215, %216 : vector<2x32xf32>
    %218 = math.tanh %217 : vector<2x32xf32>
    %219 = arith.mulf %214, %218 : vector<2x32xf32>
    %220 = tpu.concatenate %219, %200 in 1 : vector<2x32xf32>, vector<2x32xf32> -> vector<2x64xf32>
    %221 = arith.truncf %220 : vector<2x64xf32> to vector<2x64xbf16>
    %cst_35 = arith.constant dense<0.000000e+00> : vector<2x128xf32>
    %222 = tpu.matmul %221, %7, %cst_35 {dimension_numbers = #tpu.dot_dimension_numbers<[1], [0], [0], [1], [0, 0, 1, 1], [], []>} : vector<2x64xbf16>, vector<64x128xbf16>, vector<2x128xf32> -> vector<2x128xf32>
    %223 = arith.addf %222, %10 : vector<2x128xf32>
    %224 = arith.negf %223 : vector<2x128xf32>
    %225 = math.exp %224 : vector<2x128xf32>
    %cst_36 = arith.constant 1.000000e+00 : f32
    %226 = vector.broadcast %cst_36 : f32 to vector<2x128xf32>
    %227 = arith.addf %226, %225 : vector<2x128xf32>
    %228 = arith.divf %226, %227 : vector<2x128xf32>
    %229 = math.tanh %223 : vector<2x128xf32>
    %230 = vector.extract_strided_slice %228 {offsets = [0, 0], sizes = [2, 32], strides = [1, 1]} : vector<2x128xf32> to vector<2x32xf32>
    %231 = vector.extract_strided_slice %228 {offsets = [0, 32], sizes = [2, 32], strides = [1, 1]} : vector<2x128xf32> to vector<2x32xf32>
    %232 = vector.extract_strided_slice %229 {offsets = [0, 64], sizes = [2, 32], strides = [1, 1]} : vector<2x128xf32> to vector<2x32xf32>
    %233 = vector.extract_strided_slice %228 {offsets = [0, 96], sizes = [2, 32], strides = [1, 1]} : vector<2x128xf32> to vector<2x32xf32>
    %234 = arith.mulf %231, %198 : vector<2x32xf32>
    %235 = arith.mulf %230, %232 : vector<2x32xf32>
    %236 = arith.addf %234, %235 : vector<2x32xf32>
    %237 = math.tanh %236 : vector<2x32xf32>
    %238 = arith.mulf %233, %237 : vector<2x32xf32>
    %239 = vector.extract_strided_slice %5 {offsets = [12, 0], sizes = [2, 128], strides = [1, 1]} : vector<16x128xf32> to vector<2x128xf32>
    %240 = arith.truncf %219 : vector<2x32xf32> to vector<2x32xbf16>
    %cst_37 = arith.constant dense<0.000000e+00> : vector<2x128xf32>
    %241 = tpu.matmul %240, %6, %cst_37 {dimension_numbers = #tpu.dot_dimension_numbers<[1], [0], [0], [1], [0, 0, 1, 1], [], []>} : vector<2x32xbf16>, vector<32x128xbf16>, vector<2x128xf32> -> vector<2x128xf32>
    %242 = arith.addf %239, %241 : vector<2x128xf32>
    %243 = arith.negf %242 : vector<2x128xf32>
    %244 = math.exp %243 : vector<2x128xf32>
    %cst_38 = arith.constant 1.000000e+00 : f32
    %245 = vector.broadcast %cst_38 : f32 to vector<2x128xf32>
    %246 = arith.addf %245, %244 : vector<2x128xf32>
    %247 = arith.divf %245, %246 : vector<2x128xf32>
    %248 = math.tanh %242 : vector<2x128xf32>
    %249 = vector.extract_strided_slice %247 {offsets = [0, 0], sizes = [2, 32], strides = [1, 1]} : vector<2x128xf32> to vector<2x32xf32>
    %250 = vector.extract_strided_slice %247 {offsets = [0, 32], sizes = [2, 32], strides = [1, 1]} : vector<2x128xf32> to vector<2x32xf32>
    %251 = vector.extract_strided_slice %248 {offsets = [0, 64], sizes = [2, 32], strides = [1, 1]} : vector<2x128xf32> to vector<2x32xf32>
    %252 = vector.extract_strided_slice %247 {offsets = [0, 96], sizes = [2, 32], strides = [1, 1]} : vector<2x128xf32> to vector<2x32xf32>
    %253 = arith.mulf %250, %217 : vector<2x32xf32>
    %254 = arith.mulf %249, %251 : vector<2x32xf32>
    %255 = arith.addf %253, %254 : vector<2x32xf32>
    %256 = math.tanh %255 : vector<2x32xf32>
    %257 = arith.mulf %252, %256 : vector<2x32xf32>
    %258 = tpu.concatenate %257, %238 in 1 : vector<2x32xf32>, vector<2x32xf32> -> vector<2x64xf32>
    %259 = arith.truncf %258 : vector<2x64xf32> to vector<2x64xbf16>
    %cst_39 = arith.constant dense<0.000000e+00> : vector<2x128xf32>
    %260 = tpu.matmul %259, %7, %cst_39 {dimension_numbers = #tpu.dot_dimension_numbers<[1], [0], [0], [1], [0, 0, 1, 1], [], []>} : vector<2x64xbf16>, vector<64x128xbf16>, vector<2x128xf32> -> vector<2x128xf32>
    %261 = arith.addf %260, %10 : vector<2x128xf32>
    %262 = arith.negf %261 : vector<2x128xf32>
    %263 = math.exp %262 : vector<2x128xf32>
    %cst_40 = arith.constant 1.000000e+00 : f32
    %264 = vector.broadcast %cst_40 : f32 to vector<2x128xf32>
    %265 = arith.addf %264, %263 : vector<2x128xf32>
    %266 = arith.divf %264, %265 : vector<2x128xf32>
    %267 = math.tanh %261 : vector<2x128xf32>
    %268 = vector.extract_strided_slice %266 {offsets = [0, 0], sizes = [2, 32], strides = [1, 1]} : vector<2x128xf32> to vector<2x32xf32>
    %269 = vector.extract_strided_slice %266 {offsets = [0, 32], sizes = [2, 32], strides = [1, 1]} : vector<2x128xf32> to vector<2x32xf32>
    %270 = vector.extract_strided_slice %267 {offsets = [0, 64], sizes = [2, 32], strides = [1, 1]} : vector<2x128xf32> to vector<2x32xf32>
    %271 = vector.extract_strided_slice %266 {offsets = [0, 96], sizes = [2, 32], strides = [1, 1]} : vector<2x128xf32> to vector<2x32xf32>
    %272 = arith.mulf %269, %236 : vector<2x32xf32>
    %273 = arith.mulf %268, %270 : vector<2x32xf32>
    %274 = arith.addf %272, %273 : vector<2x32xf32>
    %275 = math.tanh %274 : vector<2x32xf32>
    %276 = arith.mulf %271, %275 : vector<2x32xf32>
    %277 = vector.extract_strided_slice %5 {offsets = [14, 0], sizes = [2, 128], strides = [1, 1]} : vector<16x128xf32> to vector<2x128xf32>
    %278 = arith.truncf %257 : vector<2x32xf32> to vector<2x32xbf16>
    %cst_41 = arith.constant dense<0.000000e+00> : vector<2x128xf32>
    %279 = tpu.matmul %278, %6, %cst_41 {dimension_numbers = #tpu.dot_dimension_numbers<[1], [0], [0], [1], [0, 0, 1, 1], [], []>} : vector<2x32xbf16>, vector<32x128xbf16>, vector<2x128xf32> -> vector<2x128xf32>
    %280 = arith.addf %277, %279 : vector<2x128xf32>
    %281 = arith.negf %280 : vector<2x128xf32>
    %282 = math.exp %281 : vector<2x128xf32>
    %cst_42 = arith.constant 1.000000e+00 : f32
    %283 = vector.broadcast %cst_42 : f32 to vector<2x128xf32>
    %284 = arith.addf %283, %282 : vector<2x128xf32>
    %285 = arith.divf %283, %284 : vector<2x128xf32>
    %286 = math.tanh %280 : vector<2x128xf32>
    %287 = vector.extract_strided_slice %285 {offsets = [0, 0], sizes = [2, 32], strides = [1, 1]} : vector<2x128xf32> to vector<2x32xf32>
    %288 = vector.extract_strided_slice %285 {offsets = [0, 32], sizes = [2, 32], strides = [1, 1]} : vector<2x128xf32> to vector<2x32xf32>
    %289 = vector.extract_strided_slice %286 {offsets = [0, 64], sizes = [2, 32], strides = [1, 1]} : vector<2x128xf32> to vector<2x32xf32>
    %290 = vector.extract_strided_slice %285 {offsets = [0, 96], sizes = [2, 32], strides = [1, 1]} : vector<2x128xf32> to vector<2x32xf32>
    %291 = arith.mulf %288, %255 : vector<2x32xf32>
    %292 = arith.mulf %287, %289 : vector<2x32xf32>
    %293 = arith.addf %291, %292 : vector<2x32xf32>
    %294 = math.tanh %293 : vector<2x32xf32>
    %295 = arith.mulf %290, %294 : vector<2x32xf32>
    %296 = tpu.concatenate %295, %276 in 1 : vector<2x32xf32>, vector<2x32xf32> -> vector<2x64xf32>
    %297 = arith.truncf %296 : vector<2x64xf32> to vector<2x64xbf16>
    %cst_43 = arith.constant dense<0.000000e+00> : vector<2x128xf32>
    %298 = tpu.matmul %297, %7, %cst_43 {dimension_numbers = #tpu.dot_dimension_numbers<[1], [0], [0], [1], [0, 0, 1, 1], [], []>} : vector<2x64xbf16>, vector<64x128xbf16>, vector<2x128xf32> -> vector<2x128xf32>
    %299 = arith.addf %298, %10 : vector<2x128xf32>
    %300 = arith.negf %299 : vector<2x128xf32>
    %301 = math.exp %300 : vector<2x128xf32>
    %cst_44 = arith.constant 1.000000e+00 : f32
    %302 = vector.broadcast %cst_44 : f32 to vector<2x128xf32>
    %303 = arith.addf %302, %301 : vector<2x128xf32>
    %304 = arith.divf %302, %303 : vector<2x128xf32>
    %305 = math.tanh %299 : vector<2x128xf32>
    %306 = vector.extract_strided_slice %304 {offsets = [0, 0], sizes = [2, 32], strides = [1, 1]} : vector<2x128xf32> to vector<2x32xf32>
    %307 = vector.extract_strided_slice %304 {offsets = [0, 32], sizes = [2, 32], strides = [1, 1]} : vector<2x128xf32> to vector<2x32xf32>
    %308 = vector.extract_strided_slice %305 {offsets = [0, 64], sizes = [2, 32], strides = [1, 1]} : vector<2x128xf32> to vector<2x32xf32>
    %309 = vector.extract_strided_slice %304 {offsets = [0, 96], sizes = [2, 32], strides = [1, 1]} : vector<2x128xf32> to vector<2x32xf32>
    %310 = arith.mulf %307, %274 : vector<2x32xf32>
    %311 = arith.mulf %306, %308 : vector<2x32xf32>
    %312 = arith.addf %310, %311 : vector<2x32xf32>
    %313 = math.tanh %312 : vector<2x32xf32>
    %314 = arith.mulf %309, %313 : vector<2x32xf32>
    %c0_45 = arith.constant 0 : index
    %c0_46 = arith.constant 0 : index
    %315 = vector.load %arg6[%c0_45, %c0_46] : memref<32x32xf32, #tpu.memory_space<vmem>>, vector<32x32xf32>
    %cst_47 = arith.constant dense<0.000000e+00> : vector<2x32xf32>
    %316 = tpu.matmul %314, %315, %cst_47 {dimension_numbers = #tpu.dot_dimension_numbers<[1], [0], [0], [1], [0, 0, 1, 1], [], []>} : vector<2x32xf32>, vector<32x32xf32>, vector<2x32xf32> -> vector<2x32xf32>
    %c0_48 = arith.constant 0 : index
    %c0_49 = arith.constant 0 : index
    %317 = vector.load %arg7[%c0_48, %c0_49] : memref<1x32xf32, #tpu.memory_space<vmem>>, vector<1x32xf32>
    %318 = vector.broadcast %317 : vector<1x32xf32> to vector<2x32xf32>
    %319 = arith.addf %316, %318 : vector<2x32xf32>
    %cst_50 = arith.constant 0.000000e+00 : f32
    %320 = vector.broadcast %cst_50 : f32 to vector<2x32xf32>
    %321 = arith.maximumf %319, %320 : vector<2x32xf32>
    %c0_51 = arith.constant 0 : index
    %c0_52 = arith.constant 0 : index
    %322 = vector.load %arg8[%c0_51, %c0_52] : memref<32x4xf32, #tpu.memory_space<vmem>>, vector<32x4xf32>
    %cst_53 = arith.constant dense<0.000000e+00> : vector<2x4xf32>
    %323 = tpu.matmul %321, %322, %cst_53 {dimension_numbers = #tpu.dot_dimension_numbers<[1], [0], [0], [1], [0, 0, 1, 1], [], []>} : vector<2x32xf32>, vector<32x4xf32>, vector<2x4xf32> -> vector<2x4xf32>
    %c0_54 = arith.constant 0 : index
    %c0_55 = arith.constant 0 : index
    %324 = vector.load %arg9[%c0_54, %c0_55] : memref<1x4xf32, #tpu.memory_space<vmem>>, vector<1x4xf32>
    %325 = vector.broadcast %324 : vector<1x4xf32> to vector<2x4xf32>
    %326 = arith.addf %323, %325 : vector<2x4xf32>
    %c0_56 = arith.constant 0 : index
    %c0_57 = arith.constant 0 : index
    %327 = vector.load %arg10[%c0_56, %c0_57] : memref<2x4xf32, #tpu.memory_space<vmem>>, vector<2x4xf32>
    tpu.vector_store %arg10[%c0_56, %c0_57], %326 {strides = array<i32>} : memref<2x4xf32, #tpu.memory_space<vmem>>, vector<2x4xf32>,
    return
  }
}

</mosaic_0001>

<llo_original>
// kernel: tpu_custom_call.1
$region0: #{tpu_custom_call.1}
  #allocation0 [shape = 'u32[]', space=smem, size = 0x4, offset = 0x4, fixed_abs, tag = 'smem constant byte address 0x4 - core index']
  #allocation1 [shape = 'u32[144,128]{1,0:T(1,128)}', space=vmem, size = 0x12000, scoped, tag = 'internal scratch']
  %s0 = inlined_call_operand.vmem [shape: bf16[16,8], index: 0, kind: input, shape index: {}]
  %s1 = inlined_call_operand.hbm [shape: bf16[8,128], index: 1, kind: input, shape index: {}]
  %s2 = inlined_call_operand.hbm [shape: bf16[32,128], index: 2, kind: input, shape index: {}]
  %s3 = inlined_call_operand.vmem [shape: f32[1,128], index: 3, kind: input, shape index: {}]
  %s4 = inlined_call_operand.vmem [shape: bf16[64,128], index: 4, kind: input, shape index: {}]
  %s5 = inlined_call_operand.vmem [shape: f32[1,128], index: 5, kind: input, shape index: {}]
  %s6 = inlined_call_operand.vmem [shape: f32[32,32], index: 6, kind: input, shape index: {}]
  %s7 = inlined_call_operand.vmem [shape: f32[1,32], index: 7, kind: input, shape index: {}]
  %s8 = inlined_call_operand.vmem [shape: f32[32,4], index: 8, kind: input, shape index: {}]
  %s9 = inlined_call_operand.vmem [shape: f32[1,4], index: 9, kind: input, shape index: {}]
  %s10 = inlined_call_operand.hbm [shape: f32[2,4], index: 10, kind: output, shape index: {}]
  %s11 = sld [smem:[#allocation0]]
  $region58: #{tpu_custom_call.1} parent=0
    _
  %s13 = ssub.s32 1, %s11
  %s14 = scalar_select 0, %s13, %s11
  $region1: #{tpu_custom_call.1} parent=0
    #allocation2 [shape = 'u8[2048]{0}', space=vmem, size = 0x800, scoped, tag = 'input window, operand 1, single buffered']
    #allocation3 [shape = 's32[1]{0}', space=sflag, size = 0x4, scoped, tag = 'scoped memory for tpu_custom_call.1']
    #allocation4 [shape = 's32[1]{0}', space=sflag, size = 0x4, scoped, tag = 'scoped memory for tpu_custom_call.1']
    #allocation5 [shape = 'u8[8192]{0}', space=vmem, size = 0x2000, scoped, tag = 'input window, operand 2, single buffered']
    #allocation6 [shape = 's32[1]{0}', space=sflag, size = 0x4, scoped, tag = 'scoped memory for tpu_custom_call.1']
    #allocation7 [shape = 'u8[1024]{0}', space=vmem, size = 0x400, scoped, tag = 'output window, operand 0, single buffered']
    %15 = vsyncpa [#allocation3], 0
    %16 = vsyncpa [#allocation6], 0
    %17 = vsyncpa [#allocation4], 0
    // Predicated region
    $region2: #{tpu_custom_call.1} parent=1 // pred_check
      _
    $region3: #{tpu_custom_call.1} parent=1 // pred_check_branch
      %19 = sbr.rel (0) target = $region5
    $region4: #{tpu_custom_call.1} parent=1 // pred_region
      _
    $region5: #{tpu_custom_call.1} parent=1 // pred_fallthru
      _
    // Predicated region
    $region6: #{tpu_custom_call.1} parent=1 // pred_check
      _
    $region7: #{tpu_custom_call.1} parent=1 // pred_check_branch
      %21 = sbr.rel (0) target = $region9
    $region8: #{tpu_custom_call.1} parent=1 // pred_region
      %s23 = ssub.s32 64, 64
      %24 = vsyncadd [#allocation3], %s23
      %s26 = sshll.u32 [#allocation2], 4
      %s27 = int_to_ptr.vmem [resolvable:$true] %s26
      %29 = dma.hbm_to_vmem [thread:$0]  %s1, 64, %s27, [#allocation3]
    $region9: #{tpu_custom_call.1} parent=1 // pred_fallthru
      _
    // Predicated region
    $region10: #{tpu_custom_call.1} parent=1 // pred_check
      _
    $region11: #{tpu_custom_call.1} parent=1 // pred_check_branch
      %31 = sbr.rel (0) target = $region13
    $region12: #{tpu_custom_call.1} parent=1 // pred_region
      %s33 = ssub.s32 256, 256
      %34 = vsyncadd [#allocation6], %s33
      %s35 = sshll.u32 [#allocation5], 4
      %s36 = int_to_ptr.vmem [resolvable:$true] %s35
      %41 = dma.hbm_to_vmem [thread:$0]  %s2, 256, %s36, [#allocation6], 64, 64, 4
    $region13: #{tpu_custom_call.1} parent=1 // pred_fallthru
      _
    // Predicated region
    $region14: #{tpu_custom_call.1} parent=1 // pred_check
      _
    $region15: #{tpu_custom_call.1} parent=1 // pred_check_branch
      %43 = sbr.rel (0) target = $region17
    $region16: #{tpu_custom_call.1} parent=1 // pred_region
      _
    $region17: #{tpu_custom_call.1} parent=1 // pred_fallthru
      _
    // Predicated region
    $region18: #{tpu_custom_call.1} parent=1 // pred_check
      _
    $region19: #{tpu_custom_call.1} parent=1 // pred_check_branch
      %45 = sbr.rel (0) target = $region21
    $region20: #{tpu_custom_call.1} parent=1 // pred_region
      _
    $region21: #{tpu_custom_call.1} parent=1 // pred_fallthru
      _
    // Predicated region
    $region22: #{tpu_custom_call.1} parent=1 // pred_check
      _
    $region23: #{tpu_custom_call.1} parent=1 // pred_check_branch
      %47 = sbr.rel (0) target = $region25
    $region24: #{tpu_custom_call.1} parent=1 // pred_region
      _
    $region25: #{tpu_custom_call.1} parent=1 // pred_fallthru
      _
    // Predicated region
    $region26: #{tpu_custom_call.1} parent=1 // pred_check
      _
    $region27: #{tpu_custom_call.1} parent=1 // pred_check_branch
      %49 = sbr.rel (0) target = $region29
    $region28: #{tpu_custom_call.1} parent=1 // pred_region
      _
    $region29: #{tpu_custom_call.1} parent=1 // pred_fallthru
      _
    // Predicated region
    $region30: #{tpu_custom_call.1} parent=1 // pred_check
      _
    $region31: #{tpu_custom_call.1} parent=1 // pred_check_branch
      %51 = sbr.rel (0) target = $region33
    $region32: #{tpu_custom_call.1} parent=1 // pred_region
      _
    $region33: #{tpu_custom_call.1} parent=1 // pred_fallthru
      _
    // Predicated region
    $region34: #{tpu_custom_call.1} parent=1 // pred_check
      _
    $region35: #{tpu_custom_call.1} parent=1 // pred_check_branch
      %53 = sbr.rel (0) target = $region37
    $region36: #{tpu_custom_call.1} parent=1 // pred_region
      _
    $region37: #{tpu_custom_call.1} parent=1 // pred_fallthru
      _
    // Predicated region
    $region38: #{tpu_custom_call.1} parent=1 // pred_check
      _
    $region39: #{tpu_custom_call.1} parent=1 // pred_check_branch
      %55 = sbr.rel (0) target = $region41
    $region40: #{tpu_custom_call.1} parent=1 // pred_region
      _
    $region41: #{tpu_custom_call.1} parent=1 // pred_fallthru
      _
    // Predicated region
    $region42: #{tpu_custom_call.1} parent=1 // pred_check
      _
    $region43: #{tpu_custom_call.1} parent=1 // pred_check_branch
      %57 = sbr.rel (0) target = $region45
    $region44: #{tpu_custom_call.1} parent=1 // pred_region
      %58 = dma.done [#allocation3], 64
    $region45: #{tpu_custom_call.1} parent=1 // pred_fallthru
      _
    // Predicated region
    $region46: #{tpu_custom_call.1} parent=1 // pred_check
      _
    $region47: #{tpu_custom_call.1} parent=1 // pred_check_branch
      %60 = sbr.rel (0) target = $region49
    $region48: #{tpu_custom_call.1} parent=1 // pred_region
      %61 = dma.done [#allocation6], 256
    $region49: #{tpu_custom_call.1} parent=1 // pred_fallthru
      _
    %v63 = vld [vmem:[%s0] sm:$0xf]
    %v64 = vld [vmem:[%s0 + $0x4] sm:$0xf]
    %v65 = vld [vmem:[#allocation2] sm:$0xf]
    %v66 = vld [vmem:[%s3] sm:$0x1]
    %v68 = vlaneseq
    %v69 = vshrl.u32 %v68, 7
    %v70 = vsub.s32 0, %v69
    %v71 = vrot.slane %v66, %v70
    %v75 = vunpack.c.l.b16 %v63
    %v76 = vunpack.c.l.b16 %v64
    %v77 = vpack.c.b16 %v76, %v75
    %vm78 = vcmask 64512
    %v80 = vsel %vm78, %v77, 0
    %vm82 = vcmask 1043456
    %v84 = vsel %vm82, %v65, 0
    %86 = vmatprep.subr.bf16.mxu0 0
    %87 = vmatpush1.bf16.msra.mxu0 %v84
    %88 = vmatprep.subr.bf16.mxu0 0
    %89 = vmatpush1.bf16.msra.mxu0 0
    %90 = vmatprep.subr.bf16.mxu0 0
    %91 = vmatpush1.bf16.msra.mxu0 0
    %92 = vmatprep.subr.bf16.mxu0 0
    %93 = vmatpush1.bf16.msra.mxu0 0
    %94 = vmatprep.subr.bf16.mxu0 0
    %95 = vmatpush1.bf16.msra.mxu0 0
    %96 = vmatprep.subr.bf16.mxu0 0
    %97 = vmatpush1.bf16.msra.mxu0 0
    %98 = vmatprep.subr.bf16.mxu0 0
    %99 = vmatpush1.bf16.msra.mxu0 0
    %100 = vmatprep.subr.bf16.mxu0 0
    %101 = vmatpush1.bf16.msra.mxu0 0
    %102 = vmatprep.subr.bf16.mxu0 0
    %103 = vmatpush1.bf16.msra.mxu0 0
    %104 = vmatprep.subr.bf16.mxu0 0
    %105 = vmatpush1.bf16.msra.mxu0 0
    %106 = vmatprep.subr.bf16.mxu0 0
    %107 = vmatpush1.bf16.msra.mxu0 0
    %108 = vmatprep.subr.bf16.mxu0 0
    %109 = vmatpush1.bf16.msra.mxu0 0
    %110 = vmatprep.subr.bf16.mxu0 0
    %111 = vmatpush1.bf16.msra.mxu0 0
    %112 = vmatprep.subr.bf16.mxu0 0
    %113 = vmatpush1.bf16.msra.mxu0 0
    %114 = vmatprep.subr.bf16.mxu0 0
    %115 = vmatpush1.bf16.msra.mxu0 0
    %116 = vmatprep.subr.bf16.mxu0 0
    %117 = vmatpush1.bf16.msra.mxu0 0
    %118 = vmatprep.mubr.bf16.mxu0 0
    %119 = vmatmul.mubr.bf16.gmra.mrb[0].mxu0 %v80
    %v120 = vpop.f32.mrb[0].mxu0
    %v121 = vadd.f32 %v71, %v120
    %v122 = vpop.f32.mrb[0].mxu0
    %v123 = vpop.f32.mrb[0].mxu0
    %v124 = vadd.f32 %v71, %v123
    %v125 = vpop.f32.mrb[0].mxu0
    %126 = vdwg.mxu0
    %v127 = vld [vmem:[#allocation5] sm:$0xf]
    %v128 = vld [vmem:[#allocation5 + $0x4] sm:$0xf]
    %v129 = vld [vmem:[#allocation5 + $0x8] sm:$0xf]
    %v130 = vld [vmem:[#allocation5 + $0xc] sm:$0xf]
    %v131 = vld [vmem:[%s4] sm:$0xf]
    %v132 = vld [vmem:[%s4 + $0x4] sm:$0xf]
    %v133 = vld [vmem:[%s4 + $0x8] sm:$0xf]
    %v134 = vld [vmem:[%s4 + $0xc] sm:$0xf]
    %v135 = vld [vmem:[%s4 + $0x10] sm:$0xf]
    %v136 = vld [vmem:[%s4 + $0x14] sm:$0xf]
    %v137 = vld [vmem:[%s4 + $0x18] sm:$0xf]
    %v138 = vld [vmem:[%s4 + $0x1c] sm:$0xf]
    %v139 = vld [vmem:[%s5] sm:$0x1]
    %v141 = vlaneseq
    %v142 = vshrl.u32 %v141, 7
    %v143 = vsub.s32 0, %v142
    %v144 = vrot.slane %v139, %v143
    %v146 = vxor.u32 %v121, 2147483648
    %v147 = vmul.f32 %v146, 1.442695
    %v148 = vpow.pop %v147
    %v149 = vadd.f32 %v148, 1.0
    %v150 = vrcp.pop %v149
    %v151 = vmul.f32 1.0, %v150
    %v152 = vtanh.pop %v121
    %v153 = vmul.f32 %v151, 0.0
    %155 = vrot.lane.b32.xlu0 %v152, 64
    %v156 = vpop.permute.xlu0 %155
    %v158 = vmul.f32 %v151, %v156
    %160 = vrot.lane.b32.xlu0 %v158, 32
    %v161 = vpop.permute.xlu0 %160
    %v163 = vadd.f32 %v153, %v161
    %v164 = vtanh.pop %v163
    %166 = vrot.lane.b32.xlu0 %v164, 64
    %v167 = vpop.permute.xlu0 %166
    %v169 = vmul.f32 %v151, %v167
    %171 = vrot.lane.b32.xlu0 %v169, 32
    %v172 = vpop.permute.xlu0 %171
    %vm174 = vcmask 261120
    %v175 = vsel %vm174, %v172, 0.0
    %v176 = vpack.c.bf16 %v175, %v175
    %v185 = vunpack.c.l.b16 %v131
    %v186 = vunpack.c.l.b16 %v132
    %v187 = vunpack.c.l.b16 %v133
    %v188 = vunpack.c.l.b16 %v134
    %v189 = vunpack.c.l.b16 %v135
    %v190 = vunpack.c.l.b16 %v136
    %v191 = vunpack.c.l.b16 %v137
    %v192 = vunpack.c.l.b16 %v138
    %v193 = vpack.c.b16 %v186, %v185
    %v194 = vpack.c.b16 %v188, %v187
    %v195 = vpack.c.b16 %v190, %v189
    %v196 = vpack.c.b16 %v192, %v191
    %vm201 = vcmask 523264
    %v203 = vsel %vm201, %v176, 0
    %205 = vmatprep.subr.bf16.mxu0 0
    %206 = vmatpush1.bf16.msra.mxu0 %v193
    %207 = vmatprep.subr.bf16.mxu0 0
    %208 = vmatpush1.bf16.msra.mxu0 %v194
    %209 = vmatprep.subr.bf16.mxu0 0
    %210 = vmatpush1.bf16.msra.mxu0 %v195
    %211 = vmatprep.subr.bf16.mxu0 0
    %212 = vmatpush1.bf16.msra.mxu0 %v196
    %213 = vmatprep.subr.bf16.mxu0 0
    %214 = vmatpush1.bf16.msra.mxu0 0
    %215 = vmatprep.subr.bf16.mxu0 0
    %216 = vmatpush1.bf16.msra.mxu0 0
    %217 = vmatprep.subr.bf16.mxu0 0
    %218 = vmatpush1.bf16.msra.mxu0 0
    %219 = vmatprep.subr.bf16.mxu0 0
    %220 = vmatpush1.bf16.msra.mxu0 0
    %221 = vmatprep.subr.bf16.mxu0 0
    %222 = vmatpush1.bf16.msra.mxu0 0
    %223 = vmatprep.subr.bf16.mxu0 0
    %224 = vmatpush1.bf16.msra.mxu0 0
    %225 = vmatprep.subr.bf16.mxu0 0
    %226 = vmatpush1.bf16.msra.mxu0 0
    %227 = vmatprep.subr.bf16.mxu0 0
    %228 = vmatpush1.bf16.msra.mxu0 0
    %229 = vmatprep.subr.bf16.mxu0 0
    %230 = vmatpush1.bf16.msra.mxu0 0
    %231 = vmatprep.subr.bf16.mxu0 0
    %232 = vmatpush1.bf16.msra.mxu0 0
    %233 = vmatprep.subr.bf16.mxu0 0
    %234 = vmatpush1.bf16.msra.mxu0 0
    %235 = vmatprep.subr.bf16.mxu0 0
    %236 = vmatpush1.bf16.msra.mxu0 0
    %237 = vmatprep.mubr.bf16.mxu0 0
    %238 = vmatmul.mubr.bf16.gmra.mrb[0].mxu0 %v203
    %v239 = vpop.f32.mrb[0].mxu0
    %v240 = vadd.f32 %v144, %v239
    %v241 = vpop.f32.mrb[0].mxu0
    %v242 = vpop.f32.mrb[0].mxu0
    %v243 = vpop.f32.mrb[0].mxu0
    %244 = vdwg.mxu0
    %v245 = vxor.u32 %v240, 2147483648
    %v246 = vmul.f32 %v245, 1.442695
    %v247 = vpow.pop %v246
    %v248 = vadd.f32 %v247, 1.0
    %v249 = vrcp.pop %v248
    %v250 = vmul.f32 1.0, %v249
    %v251 = vtanh.pop %v240
    %v252 = vmul.f32 %v250, 0.0
    %254 = vrot.lane.b32.xlu0 %v251, 64
    %v255 = vpop.permute.xlu0 %254
    %v257 = vmul.f32 %v250, %v255
    %259 = vrot.lane.b32.xlu0 %v257, 32
    %v260 = vpop.permute.xlu0 %259
    %v262 = vadd.f32 %v252, %v260
    %v263 = vtanh.pop %v262
    %265 = vrot.lane.b32.xlu0 %v263, 64
    %v266 = vpop.permute.xlu0 %265
    %v268 = vmul.f32 %v250, %v266
    %v269 = vpack.c.bf16 %v169, %v169
    %271 = vrot.lane.b32.xlu0 %v269, 32
    %v272 = vpop.permute.xlu0 %271
    %v277 = vunpack.c.l.b16 %v127
    %v278 = vunpack.c.l.b16 %v128
    %v279 = vunpack.c.l.b16 %v129
    %v280 = vunpack.c.l.b16 %v130
    %v281 = vpack.c.b16 %v278, %v277
    %v282 = vpack.c.b16 %v280, %v279
    %v286 = vsel %vm174, %v272, 0
    %288 = vmatprep.subr.bf16.mxu0 0
    %289 = vmatpush1.bf16.msra.mxu0 %v281
    %290 = vmatprep.subr.bf16.mxu0 0
    %291 = vmatpush1.bf16.msra.mxu0 %v282
    %292 = vmatprep.subr.bf16.mxu0 0
    %293 = vmatpush1.bf16.msra.mxu0 0
    %294 = vmatprep.subr.bf16.mxu0 0
    %295 = vmatpush1.bf16.msra.mxu0 0
    %296 = vmatprep.subr.bf16.mxu0 0
    %297 = vmatpush1.bf16.msra.mxu0 0
    %298 = vmatprep.subr.bf16.mxu0 0
    %299 = vmatpush1.bf16.msra.mxu0 0
    %300 = vmatprep.subr.bf16.mxu0 0
    %301 = vmatpush1.bf16.msra.mxu0 0
    %302 = vmatprep.subr.bf16.mxu0 0
    %303 = vmatpush1.bf16.msra.mxu0 0
    %304 = vmatprep.subr.bf16.mxu0 0
    %305 = vmatpush1.bf16.msra.mxu0 0
    %306 = vmatprep.subr.bf16.mxu0 0
    %307 = vmatpush1.bf16.msra.mxu0 0
    %308 = vmatprep.subr.bf16.mxu0 0
    %309 = vmatpush1.bf16.msra.mxu0 0
    %310 = vmatprep.subr.bf16.mxu0 0
    %311 = vmatpush1.bf16.msra.mxu0 0
    %312 = vmatprep.subr.bf16.mxu0 0
    %313 = vmatpush1.bf16.msra.mxu0 0
    %314 = vmatprep.subr.bf16.mxu0 0
    %315 = vmatpush1.bf16.msra.mxu0 0
    %316 = vmatprep.subr.bf16.mxu0 0
    %317 = vmatpush1.bf16.msra.mxu0 0
    %318 = vmatprep.subr.bf16.mxu0 0
    %319 = vmatpush1.bf16.msra.mxu0 0
    %320 = vmatprep.mubr.bf16.mxu0 0
    %321 = vmatmul.mubr.bf16.gmra.mrb[0].mxu0 %v286
    %v322 = vpop.f32.mrb[0].mxu0
    %v323 = vadd.f32 0.0, %v322
    %v324 = vpop.f32.mrb[0].mxu0
    %v325 = vpop.f32.mrb[0].mxu0
    %v326 = vpop.f32.mrb[0].mxu0
    %327 = vdwg.mxu0
    %v329 = vrot.slane %v323, 6
    %v331 = vadd.f32 %v121, %v329
    %v332 = vxor.u32 %v331, 2147483648
    %v333 = vmul.f32 %v332, 1.442695
    %v334 = vpow.pop %v333
    %v335 = vadd.f32 %v334, 1.0
    %v336 = vrcp.pop %v335
    %v337 = vmul.f32 1.0, %v336
    %v338 = vtanh.pop %v331
    %v340 = vrot.slane %v163, 6
    %v342 = vmul.f32 %v337, %v340
    %344 = vrot.lane.b32.xlu0 %v338, 64
    %v345 = vpop.permute.xlu0 %344
    %v347 = vmul.f32 %v337, %v345
    %349 = vrot.lane.b32.xlu0 %v347, 32
    %v350 = vpop.permute.xlu0 %349
    %v352 = vadd.f32 %v342, %v350
    %v353 = vtanh.pop %v352
    %355 = vrot.lane.b32.xlu0 %v353, 64
    %v356 = vpop.permute.xlu0 %355
    %v358 = vmul.f32 %v337, %v356
    %360 = vrot.lane.b32.xlu0 %v358, 32
    %v361 = vpop.permute.xlu0 %360
    %v364 = vrot.slane %v268, 6
    %365 = vrot.lane.b32.xlu0 %v364, 64
    %v366 = vpop.permute.xlu0 %365
    %v368 = vsel %vm174, %v361, %v366
    %v369 = vpack.c.bf16 %v368, %v368
    %v371 = vrot.slane %v369, 1
    %v373 = vsel %vm201, %v371, 0
    %375 = vmatprep.subr.bf16.mxu0 0
    %376 = vmatpush1.bf16.msra.mxu0 %v193
    %377 = vmatprep.subr.bf16.mxu0 0
    %378 = vmatpush1.bf16.msra.mxu0 %v194
    %379 = vmatprep.subr.bf16.mxu0 0
    %380 = vmatpush1.bf16.msra.mxu0 %v195
    %381 = vmatprep.subr.bf16.mxu0 0
    %382 = vmatpush1.bf16.msra.mxu0 %v196
    %383 = vmatprep.subr.bf16.mxu0 0
    %384 = vmatpush1.bf16.msra.mxu0 0
    %385 = vmatprep.subr.bf16.mxu0 0
    %386 = vmatpush1.bf16.msra.mxu0 0
    %387 = vmatprep.subr.bf16.mxu0 0
    %388 = vmatpush1.bf16.msra.mxu0 0
    %389 = vmatprep.subr.bf16.mxu0 0
    %390 = vmatpush1.bf16.msra.mxu0 0
    %391 = vmatprep.subr.bf16.mxu0 0
    %392 = vmatpush1.bf16.msra.mxu0 0
    %393 = vmatprep.subr.bf16.mxu0 0
    %394 = vmatpush1.bf16.msra.mxu0 0
    %395 = vmatprep.subr.bf16.mxu0 0
    %396 = vmatpush1.bf16.msra.mxu0 0
    %397 = vmatprep.subr.bf16.mxu0 0
    %398 = vmatpush1.bf16.msra.mxu0 0
    %399 = vmatprep.subr.bf16.mxu0 0
    %400 = vmatpush1.bf16.msra.mxu0 0
    %401 = vmatprep.subr.bf16.mxu0 0
    %402 = vmatpush1.bf16.msra.mxu0 0
    %403 = vmatprep.subr.bf16.mxu0 0
    %404 = vmatpush1.bf16.msra.mxu0 0
    %405 = vmatprep.subr.bf16.mxu0 0
    %406 = vmatpush1.bf16.msra.mxu0 0
    %407 = vmatprep.mubr.bf16.mxu0 0
    %408 = vmatmul.mubr.bf16.gmra.mrb[0].mxu0 %v373
    %v409 = vpop.f32.mrb[0].mxu0
    %v410 = vadd.f32 %v144, %v409
    %v411 = vpop.f32.mrb[0].mxu0
    %v412 = vpop.f32.mrb[0].mxu0
    %v413 = vpop.f32.mrb[0].mxu0
    %414 = vdwg.mxu0
    %v415 = vxor.u32 %v410, 2147483648
    %v416 = vmul.f32 %v415, 1.442695
    %v417 = vpow.pop %v416
    %v418 = vadd.f32 %v417, 1.0
    %v419 = vrcp.pop %v418
    %v420 = vmul.f32 1.0, %v419
    %v421 = vtanh.pop %v410
    %v422 = vmul.f32 %v420, %v262
    %424 = vrot.lane.b32.xlu0 %v421, 64
    %v425 = vpop.permute.xlu0 %424
    %v427 = vmul.f32 %v420, %v425
    %429 = vrot.lane.b32.xlu0 %v427, 32
    %v430 = vpop.permute.xlu0 %429
    %v432 = vadd.f32 %v422, %v430
    %v433 = vtanh.pop %v432
    %435 = vrot.lane.b32.xlu0 %v433, 64
    %v436 = vpop.permute.xlu0 %435
    %v438 = vmul.f32 %v420, %v436
    %v439 = vpack.c.bf16 %v358, %v358
    %v441 = vrot.slane %v439, 1
    %442 = vrot.lane.b32.xlu0 %v441, 32
    %v443 = vpop.permute.xlu0 %442
    %v445 = vsel %vm174, %v443, 0
    %447 = vmatprep.subr.bf16.mxu0 0
    %448 = vmatpush1.bf16.msra.mxu0 %v281
    %449 = vmatprep.subr.bf16.mxu0 0
    %450 = vmatpush1.bf16.msra.mxu0 %v282
    %451 = vmatprep.subr.bf16.mxu0 0
    %452 = vmatpush1.bf16.msra.mxu0 0
    %453 = vmatprep.subr.bf16.mxu0 0
    %454 = vmatpush1.bf16.msra.mxu0 0
    %455 = vmatprep.subr.bf16.mxu0 0
    %456 = vmatpush1.bf16.msra.mxu0 0
    %457 = vmatprep.subr.bf16.mxu0 0
    %458 = vmatpush1.bf16.msra.mxu0 0
    %459 = vmatprep.subr.bf16.mxu0 0
    %460 = vmatpush1.bf16.msra.mxu0 0
    %461 = vmatprep.subr.bf16.mxu0 0
    %462 = vmatpush1.bf16.msra.mxu0 0
    %463 = vmatprep.subr.bf16.mxu0 0
    %464 = vmatpush1.bf16.msra.mxu0 0
    %465 = vmatprep.subr.bf16.mxu0 0
    %466 = vmatpush1.bf16.msra.mxu0 0
    %467 = vmatprep.subr.bf16.mxu0 0
    %468 = vmatpush1.bf16.msra.mxu0 0
    %469 = vmatprep.subr.bf16.mxu0 0
    %470 = vmatpush1.bf16.msra.mxu0 0
    %471 = vmatprep.subr.bf16.mxu0 0
    %472 = vmatpush1.bf16.msra.mxu0 0
    %473 = vmatprep.subr.bf16.mxu0 0
    %474 = vmatpush1.bf16.msra.mxu0 0
    %475 = vmatprep.subr.bf16.mxu0 0
    %476 = vmatpush1.bf16.msra.mxu0 0
    %477 = vmatprep.subr.bf16.mxu0 0
    %478 = vmatpush1.bf16.msra.mxu0 0
    %479 = vmatprep.mubr.bf16.mxu0 0
    %480 = vmatmul.mubr.bf16.gmra.mrb[0].mxu0 %v445
    %v481 = vpop.f32.mrb[0].mxu0
    %v482 = vadd.f32 0.0, %v481
    %v483 = vpop.f32.mrb[0].mxu0
    %v484 = vpop.f32.mrb[0].mxu0
    %v485 = vpop.f32.mrb[0].mxu0
    %486 = vdwg.mxu0
    %v488 = vrot.slane %v482, 4
    %v490 = vadd.f32 %v121, %v488
    %v491 = vxor.u32 %v490, 2147483648
    %v492 = vmul.f32 %v491, 1.442695
    %v493 = vpow.pop %v492
    %v494 = vadd.f32 %v493, 1.0
    %v495 = vrcp.pop %v494
    %v496 = vmul.f32 1.0, %v495
    %v497 = vtanh.pop %v490
    %v499 = vrot.slane %v352, 6
    %v501 = vmul.f32 %v496, %v499
    %503 = vrot.lane.b32.xlu0 %v497, 64
    %v504 = vpop.permute.xlu0 %503
    %v506 = vmul.f32 %v496, %v504
    %508 = vrot.lane.b32.xlu0 %v506, 32
    %v509 = vpop.permute.xlu0 %508
    %v511 = vadd.f32 %v501, %v509
    %v512 = vtanh.pop %v511
    %514 = vrot.lane.b32.xlu0 %v512, 64
    %v515 = vpop.permute.xlu0 %514
    %v517 = vmul.f32 %v496, %v515
    %519 = vrot.lane.b32.xlu0 %v517, 32
    %v520 = vpop.permute.xlu0 %519
    %v523 = vrot.slane %v438, 4
    %524 = vrot.lane.b32.xlu0 %v523, 64
    %v525 = vpop.permute.xlu0 %524
    %v527 = vsel %vm174, %v520, %v525
    %v528 = vpack.c.bf16 %v527, %v527
    %v530 = vrot.slane %v528, 2
    %v532 = vsel %vm201, %v530, 0
    %534 = vmatprep.subr.bf16.mxu0 0
    %535 = vmatpush1.bf16.msra.mxu0 %v193
    %536 = vmatprep.subr.bf16.mxu0 0
    %537 = vmatpush1.bf16.msra.mxu0 %v194
    %538 = vmatprep.subr.bf16.mxu0 0
    %539 = vmatpush1.bf16.msra.mxu0 %v195
    %540 = vmatprep.subr.bf16.mxu0 0
    %541 = vmatpush1.bf16.msra.mxu0 %v196
    %542 = vmatprep.subr.bf16.mxu0 0
    %543 = vmatpush1.bf16.msra.mxu0 0
    %544 = vmatprep.subr.bf16.mxu0 0
    %545 = vmatpush1.bf16.msra.mxu0 0
    %546 = vmatprep.subr.bf16.mxu0 0
    %547 = vmatpush1.bf16.msra.mxu0 0
    %548 = vmatprep.subr.bf16.mxu0 0
    %549 = vmatpush1.bf16.msra.mxu0 0
    %550 = vmatprep.subr.bf16.mxu0 0
    %551 = vmatpush1.bf16.msra.mxu0 0
    %552 = vmatprep.subr.bf16.mxu0 0
    %553 = vmatpush1.bf16.msra.mxu0 0
    %554 = vmatprep.subr.bf16.mxu0 0
    %555 = vmatpush1.bf16.msra.mxu0 0
    %556 = vmatprep.subr.bf16.mxu0 0
    %557 = vmatpush1.bf16.msra.mxu0 0
    %558 = vmatprep.subr.bf16.mxu0 0
    %559 = vmatpush1.bf16.msra.mxu0 0
    %560 = vmatprep.subr.bf16.mxu0 0
    %561 = vmatpush1.bf16.msra.mxu0 0
    %562 = vmatprep.subr.bf16.mxu0 0
    %563 = vmatpush1.bf16.msra.mxu0 0
    %564 = vmatprep.subr.bf16.mxu0 0
    %565 = vmatpush1.bf16.msra.mxu0 0
    %566 = vmatprep.mubr.bf16.mxu0 0
    %567 = vmatmul.mubr.bf16.gmra.mrb[0].mxu0 %v532
    %v568 = vpop.f32.mrb[0].mxu0
    %v569 = vadd.f32 %v144, %v568
    %v570 = vpop.f32.mrb[0].mxu0
    %v571 = vpop.f32.mrb[0].mxu0
    %v572 = vpop.f32.mrb[0].mxu0
    %573 = vdwg.mxu0
    %v574 = vxor.u32 %v569, 2147483648
    %v575 = vmul.f32 %v574, 1.442695
    %v576 = vpow.pop %v575
    %v577 = vadd.f32 %v576, 1.0
    %v578 = vrcp.pop %v577
    %v579 = vmul.f32 1.0, %v578
    %v580 = vtanh.pop %v569
    %v581 = vmul.f32 %v579, %v432
    %583 = vrot.lane.b32.xlu0 %v580, 64
    %v584 = vpop.permute.xlu0 %583
    %v586 = vmul.f32 %v579, %v584
    %588 = vrot.lane.b32.xlu0 %v586, 32
    %v589 = vpop.permute.xlu0 %588
    %v591 = vadd.f32 %v581, %v589
    %v592 = vtanh.pop %v591
    %594 = vrot.lane.b32.xlu0 %v592, 64
    %v595 = vpop.permute.xlu0 %594
    %v597 = vmul.f32 %v579, %v595
    %v598 = vpack.c.bf16 %v517, %v517
    %v600 = vrot.slane %v598, 2
    %601 = vrot.lane.b32.xlu0 %v600, 32
    %v602 = vpop.permute.xlu0 %601
    %v604 = vsel %vm174, %v602, 0
    %606 = vmatprep.subr.bf16.mxu0 0
    %607 = vmatpush1.bf16.msra.mxu0 %v281
    %608 = vmatprep.subr.bf16.mxu0 0
    %609 = vmatpush1.bf16.msra.mxu0 %v282
    %610 = vmatprep.subr.bf16.mxu0 0
    %611 = vmatpush1.bf16.msra.mxu0 0
    %612 = vmatprep.subr.bf16.mxu0 0
    %613 = vmatpush1.bf16.msra.mxu0 0
    %614 = vmatprep.subr.bf16.mxu0 0
    %615 = vmatpush1.bf16.msra.mxu0 0
    %616 = vmatprep.subr.bf16.mxu0 0
    %617 = vmatpush1.bf16.msra.mxu0 0
    %618 = vmatprep.subr.bf16.mxu0 0
    %619 = vmatpush1.bf16.msra.mxu0 0
    %620 = vmatprep.subr.bf16.mxu0 0
    %621 = vmatpush1.bf16.msra.mxu0 0
    %622 = vmatprep.subr.bf16.mxu0 0
    %623 = vmatpush1.bf16.msra.mxu0 0
    %624 = vmatprep.subr.bf16.mxu0 0
    %625 = vmatpush1.bf16.msra.mxu0 0
    %626 = vmatprep.subr.bf16.mxu0 0
    %627 = vmatpush1.bf16.msra.mxu0 0
    %628 = vmatprep.subr.bf16.mxu0 0
    %629 = vmatpush1.bf16.msra.mxu0 0
    %630 = vmatprep.subr.bf16.mxu0 0
    %631 = vmatpush1.bf16.msra.mxu0 0
    %632 = vmatprep.subr.bf16.mxu0 0
    %633 = vmatpush1.bf16.msra.mxu0 0
    %634 = vmatprep.subr.bf16.mxu0 0
    %635 = vmatpush1.bf16.msra.mxu0 0
    %636 = vmatprep.subr.bf16.mxu0 0
    %637 = vmatpush1.bf16.msra.mxu0 0
    %638 = vmatprep.mubr.bf16.mxu0 0
    %639 = vmatmul.mubr.bf16.gmra.mrb[0].mxu0 %v604
    %v640 = vpop.f32.mrb[0].mxu0
    %v641 = vadd.f32 0.0, %v640
    %v642 = vpop.f32.mrb[0].mxu0
    %v643 = vpop.f32.mrb[0].mxu0
    %v644 = vpop.f32.mrb[0].mxu0
    %645 = vdwg.mxu0
    %v647 = vrot.slane %v641, 2
    %v649 = vadd.f32 %v121, %v647
    %v650 = vxor.u32 %v649, 2147483648
    %v651 = vmul.f32 %v650, 1.442695
    %v652 = vpow.pop %v651
    %v653 = vadd.f32 %v652, 1.0
    %v654 = vrcp.pop %v653
    %v655 = vmul.f32 1.0, %v654
    %v656 = vtanh.pop %v649
    %v658 = vrot.slane %v511, 6
    %v660 = vmul.f32 %v655, %v658
    %662 = vrot.lane.b32.xlu0 %v656, 64
    %v663 = vpop.permute.xlu0 %662
    %v665 = vmul.f32 %v655, %v663
    %667 = vrot.lane.b32.xlu0 %v665, 32
    %v668 = vpop.permute.xlu0 %667
    %v670 = vadd.f32 %v660, %v668
    %v671 = vtanh.pop %v670
    %673 = vrot.lane.b32.xlu0 %v671, 64
    %v674 = vpop.permute.xlu0 %673
    %v676 = vmul.f32 %v655, %v674
    %678 = vrot.lane.b32.xlu0 %v676, 32
    %v679 = vpop.permute.xlu0 %678
    %v682 = vrot.slane %v597, 2
    %683 = vrot.lane.b32.xlu0 %v682, 64
    %v684 = vpop.permute.xlu0 %683
    %v686 = vsel %vm174, %v679, %v684
    %v687 = vpack.c.bf16 %v686, %v686
    %v689 = vrot.slane %v687, 3
    %v691 = vsel %vm201, %v689, 0
    %693 = vmatprep.subr.bf16.mxu0 0
    %694 = vmatpush1.bf16.msra.mxu0 %v193
    %695 = vmatprep.subr.bf16.mxu0 0
    %696 = vmatpush1.bf16.msra.mxu0 %v194
    %697 = vmatprep.subr.bf16.mxu0 0
    %698 = vmatpush1.bf16.msra.mxu0 %v195
    %699 = vmatprep.subr.bf16.mxu0 0
    %700 = vmatpush1.bf16.msra.mxu0 %v196
    %701 = vmatprep.subr.bf16.mxu0 0
    %702 = vmatpush1.bf16.msra.mxu0 0
    %703 = vmatprep.subr.bf16.mxu0 0
    %704 = vmatpush1.bf16.msra.mxu0 0
    %705 = vmatprep.subr.bf16.mxu0 0
    %706 = vmatpush1.bf16.msra.mxu0 0
    %707 = vmatprep.subr.bf16.mxu0 0
    %708 = vmatpush1.bf16.msra.mxu0 0
    %709 = vmatprep.subr.bf16.mxu0 0
    %710 = vmatpush1.bf16.msra.mxu0 0
    %711 = vmatprep.subr.bf16.mxu0 0
    %712 = vmatpush1.bf16.msra.mxu0 0
    %713 = vmatprep.subr.bf16.mxu0 0
    %714 = vmatpush1.bf16.msra.mxu0 0
    %715 = vmatprep.subr.bf16.mxu0 0
    %716 = vmatpush1.bf16.msra.mxu0 0
    %717 = vmatprep.subr.bf16.mxu0 0
    %718 = vmatpush1.bf16.msra.mxu0 0
    %719 = vmatprep.subr.bf16.mxu0 0
    %720 = vmatpush1.bf16.msra.mxu0 0
    %721 = vmatprep.subr.bf16.mxu0 0
    %722 = vmatpush1.bf16.msra.mxu0 0
    %723 = vmatprep.subr.bf16.mxu0 0
    %724 = vmatpush1.bf16.msra.mxu0 0
    %725 = vmatprep.mubr.bf16.mxu0 0
    %726 = vmatmul.mubr.bf16.gmra.mrb[0].mxu0 %v691
    %v727 = vpop.f32.mrb[0].mxu0
    %v728 = vadd.f32 %v144, %v727
    %v729 = vpop.f32.mrb[0].mxu0
    %v730 = vpop.f32.mrb[0].mxu0
    %v731 = vpop.f32.mrb[0].mxu0
    %732 = vdwg.mxu0
    %v733 = vxor.u32 %v728, 2147483648
    %v734 = vmul.f32 %v733, 1.442695
    %v735 = vpow.pop %v734
    %v736 = vadd.f32 %v735, 1.0
    %v737 = vrcp.pop %v736
    %v738 = vmul.f32 1.0, %v737
    %v739 = vtanh.pop %v728
    %v740 = vmul.f32 %v738, %v591
    %742 = vrot.lane.b32.xlu0 %v739, 64
    %v743 = vpop.permute.xlu0 %742
    %v745 = vmul.f32 %v738, %v743
    %747 = vrot.lane.b32.xlu0 %v745, 32
    %v748 = vpop.permute.xlu0 %747
    %v750 = vadd.f32 %v740, %v748
    %v751 = vtanh.pop %v750
    %753 = vrot.lane.b32.xlu0 %v751, 64
    %v754 = vpop.permute.xlu0 %753
    %v756 = vmul.f32 %v738, %v754
    %v757 = vpack.c.bf16 %v676, %v676
    %v759 = vrot.slane %v757, 3
    %760 = vrot.lane.b32.xlu0 %v759, 32
    %v761 = vpop.permute.xlu0 %760
    %v763 = vsel %vm174, %v761, 0
    %765 = vmatprep.subr.bf16.mxu0 0
    %766 = vmatpush1.bf16.msra.mxu0 %v281
    %767 = vmatprep.subr.bf16.mxu0 0
    %768 = vmatpush1.bf16.msra.mxu0 %v282
    %769 = vmatprep.subr.bf16.mxu0 0
    %770 = vmatpush1.bf16.msra.mxu0 0
    %771 = vmatprep.subr.bf16.mxu0 0
    %772 = vmatpush1.bf16.msra.mxu0 0
    %773 = vmatprep.subr.bf16.mxu0 0
    %774 = vmatpush1.bf16.msra.mxu0 0
    %775 = vmatprep.subr.bf16.mxu0 0
    %776 = vmatpush1.bf16.msra.mxu0 0
    %777 = vmatprep.subr.bf16.mxu0 0
    %778 = vmatpush1.bf16.msra.mxu0 0
    %779 = vmatprep.subr.bf16.mxu0 0
    %780 = vmatpush1.bf16.msra.mxu0 0
    %781 = vmatprep.subr.bf16.mxu0 0
    %782 = vmatpush1.bf16.msra.mxu0 0
    %783 = vmatprep.subr.bf16.mxu0 0
    %784 = vmatpush1.bf16.msra.mxu0 0
    %785 = vmatprep.subr.bf16.mxu0 0
    %786 = vmatpush1.bf16.msra.mxu0 0
    %787 = vmatprep.subr.bf16.mxu0 0
    %788 = vmatpush1.bf16.msra.mxu0 0
    %789 = vmatprep.subr.bf16.mxu0 0
    %790 = vmatpush1.bf16.msra.mxu0 0
    %791 = vmatprep.subr.bf16.mxu0 0
    %792 = vmatpush1.bf16.msra.mxu0 0
    %793 = vmatprep.subr.bf16.mxu0 0
    %794 = vmatpush1.bf16.msra.mxu0 0
    %795 = vmatprep.subr.bf16.mxu0 0
    %796 = vmatpush1.bf16.msra.mxu0 0
    %797 = vmatprep.mubr.bf16.mxu0 0
    %798 = vmatmul.mubr.bf16.gmra.mrb[0].mxu0 %v763
    %v799 = vpop.f32.mrb[0].mxu0
    %v800 = vadd.f32 0.0, %v799
    %v801 = vpop.f32.mrb[0].mxu0
    %v802 = vpop.f32.mrb[0].mxu0
    %v803 = vpop.f32.mrb[0].mxu0
    %804 = vdwg.mxu0
    %v805 = vadd.f32 %v124, %v800
    %v806 = vxor.u32 %v805, 2147483648
    %v807 = vmul.f32 %v806, 1.442695
    %v808 = vpow.pop %v807
    %v809 = vadd.f32 %v808, 1.0
    %v810 = vrcp.pop %v809
    %v811 = vmul.f32 1.0, %v810
    %v812 = vtanh.pop %v805
    %v814 = vrot.slane %v670, 6
    %v816 = vmul.f32 %v811, %v814
    %818 = vrot.lane.b32.xlu0 %v812, 64
    %v819 = vpop.permute.xlu0 %818
    %v821 = vmul.f32 %v811, %v819
    %823 = vrot.lane.b32.xlu0 %v821, 32
    %v824 = vpop.permute.xlu0 %823
    %v826 = vadd.f32 %v816, %v824
    %v827 = vtanh.pop %v826
    %829 = vrot.lane.b32.xlu0 %v827, 64
    %v830 = vpop.permute.xlu0 %829
    %v832 = vmul.f32 %v811, %v830
    %834 = vrot.lane.b32.xlu0 %v832, 32
    %v835 = vpop.permute.xlu0 %834
    %838 = vrot.lane.b32.xlu0 %v756, 64
    %v839 = vpop.permute.xlu0 %838
    %v841 = vsel %vm174, %v835, %v839
    %v842 = vpack.c.bf16 %v841, %v841
    %v844 = vsel %vm201, %v842, 0
    %846 = vmatprep.subr.bf16.mxu0 0
    %847 = vmatpush1.bf16.msra.mxu0 %v193
    %848 = vmatprep.subr.bf16.mxu0 0
    %849 = vmatpush1.bf16.msra.mxu0 %v194
    %850 = vmatprep.subr.bf16.mxu0 0
    %851 = vmatpush1.bf16.msra.mxu0 %v195
    %852 = vmatprep.subr.bf16.mxu0 0
    %853 = vmatpush1.bf16.msra.mxu0 %v196
    %854 = vmatprep.subr.bf16.mxu0 0
    %855 = vmatpush1.bf16.msra.mxu0 0
    %856 = vmatprep.subr.bf16.mxu0 0
    %857 = vmatpush1.bf16.msra.mxu0 0
    %858 = vmatprep.subr.bf16.mxu0 0
    %859 = vmatpush1.bf16.msra.mxu0 0
    %860 = vmatprep.subr.bf16.mxu0 0
    %861 = vmatpush1.bf16.msra.mxu0 0
    %862 = vmatprep.subr.bf16.mxu0 0
    %863 = vmatpush1.bf16.msra.mxu0 0
    %864 = vmatprep.subr.bf16.mxu0 0
    %865 = vmatpush1.bf16.msra.mxu0 0
    %866 = vmatprep.subr.bf16.mxu0 0
    %867 = vmatpush1.bf16.msra.mxu0 0
    %868 = vmatprep.subr.bf16.mxu0 0
    %869 = vmatpush1.bf16.msra.mxu0 0
    %870 = vmatprep.subr.bf16.mxu0 0
    %871 = vmatpush1.bf16.msra.mxu0 0
    %872 = vmatprep.subr.bf16.mxu0 0
    %873 = vmatpush1.bf16.msra.mxu0 0
    %874 = vmatprep.subr.bf16.mxu0 0
    %875 = vmatpush1.bf16.msra.mxu0 0
    %876 = vmatprep.subr.bf16.mxu0 0
    %877 = vmatpush1.bf16.msra.mxu0 0
    %878 = vmatprep.mubr.bf16.mxu0 0
    %879 = vmatmul.mubr.bf16.gmra.mrb[0].mxu0 %v844
    %v880 = vpop.f32.mrb[0].mxu0
    %v881 = vadd.f32 %v144, %v880
    %v882 = vpop.f32.mrb[0].mxu0
    %v883 = vpop.f32.mrb[0].mxu0
    %v884 = vpop.f32.mrb[0].mxu0
    %885 = vdwg.mxu0
    %v886 = vxor.u32 %v881, 2147483648
    %v887 = vmul.f32 %v886, 1.442695
    %v888 = vpow.pop %v887
    %v889 = vadd.f32 %v888, 1.0
    %v890 = vrcp.pop %v889
    %v891 = vmul.f32 1.0, %v890
    %v892 = vtanh.pop %v881
    %v893 = vmul.f32 %v891, %v750
    %895 = vrot.lane.b32.xlu0 %v892, 64
    %v896 = vpop.permute.xlu0 %895
    %v898 = vmul.f32 %v891, %v896
    %900 = vrot.lane.b32.xlu0 %v898, 32
    %v901 = vpop.permute.xlu0 %900
    %v903 = vadd.f32 %v893, %v901
    %v904 = vtanh.pop %v903
    %906 = vrot.lane.b32.xlu0 %v904, 64
    %v907 = vpop.permute.xlu0 %906
    %v909 = vmul.f32 %v891, %v907
    %v910 = vpack.c.bf16 %v832, %v832
    %912 = vrot.lane.b32.xlu0 %v910, 32
    %v913 = vpop.permute.xlu0 %912
    %v915 = vsel %vm174, %v913, 0
    %917 = vmatprep.subr.bf16.mxu0 0
    %918 = vmatpush1.bf16.msra.mxu0 %v281
    %919 = vmatprep.subr.bf16.mxu0 0
    %920 = vmatpush1.bf16.msra.mxu0 %v282
    %921 = vmatprep.subr.bf16.mxu0 0
    %922 = vmatpush1.bf16.msra.mxu0 0
    %923 = vmatprep.subr.bf16.mxu0 0
    %924 = vmatpush1.bf16.msra.mxu0 0
    %925 = vmatprep.subr.bf16.mxu0 0
    %926 = vmatpush1.bf16.msra.mxu0 0
    %927 = vmatprep.subr.bf16.mxu0 0
    %928 = vmatpush1.bf16.msra.mxu0 0
    %929 = vmatprep.subr.bf16.mxu0 0
    %930 = vmatpush1.bf16.msra.mxu0 0
    %931 = vmatprep.subr.bf16.mxu0 0
    %932 = vmatpush1.bf16.msra.mxu0 0
    %933 = vmatprep.subr.bf16.mxu0 0
    %934 = vmatpush1.bf16.msra.mxu0 0
    %935 = vmatprep.subr.bf16.mxu0 0
    %936 = vmatpush1.bf16.msra.mxu0 0
    %937 = vmatprep.subr.bf16.mxu0 0
    %938 = vmatpush1.bf16.msra.mxu0 0
    %939 = vmatprep.subr.bf16.mxu0 0
    %940 = vmatpush1.bf16.msra.mxu0 0
    %941 = vmatprep.subr.bf16.mxu0 0
    %942 = vmatpush1.bf16.msra.mxu0 0
    %943 = vmatprep.subr.bf16.mxu0 0
    %944 = vmatpush1.bf16.msra.mxu0 0
    %945 = vmatprep.subr.bf16.mxu0 0
    %946 = vmatpush1.bf16.msra.mxu0 0
    %947 = vmatprep.subr.bf16.mxu0 0
    %948 = vmatpush1.bf16.msra.mxu0 0
    %949 = vmatprep.mubr.bf16.mxu0 0
    %950 = vmatmul.mubr.bf16.gmra.mrb[0].mxu0 %v915
    %v951 = vpop.f32.mrb[0].mxu0
    %v952 = vadd.f32 0.0, %v951
    %v953 = vpop.f32.mrb[0].mxu0
    %v954 = vpop.f32.mrb[0].mxu0
    %v955 = vpop.f32.mrb[0].mxu0
    %956 = vdwg.mxu0
    %v958 = vrot.slane %v952, 6
    %v960 = vadd.f32 %v124, %v958
    %v961 = vxor.u32 %v960, 2147483648
    %v962 = vmul.f32 %v961, 1.442695
    %v963 = vpow.pop %v962
    %v964 = vadd.f32 %v963, 1.0
    %v965 = vrcp.pop %v964
    %v966 = vmul.f32 1.0, %v965
    %v967 = vtanh.pop %v960
    %v969 = vrot.slane %v826, 6
    %v971 = vmul.f32 %v966, %v969
    %973 = vrot.lane.b32.xlu0 %v967, 64
    %v974 = vpop.permute.xlu0 %973
    %v976 = vmul.f32 %v966, %v974
    %978 = vrot.lane.b32.xlu0 %v976, 32
    %v979 = vpop.permute.xlu0 %978
    %v981 = vadd.f32 %v971, %v979
    %v982 = vtanh.pop %v981
    %984 = vrot.lane.b32.xlu0 %v982, 64
    %v985 = vpop.permute.xlu0 %984
    %v987 = vmul.f32 %v966, %v985
    %989 = vrot.lane.b32.xlu0 %v987, 32
    %v990 = vpop.permute.xlu0 %989
    %v993 = vrot.slane %v909, 6
    %994 = vrot.lane.b32.xlu0 %v993, 64
    %v995 = vpop.permute.xlu0 %994
    %v997 = vsel %vm174, %v990, %v995
    %v998 = vpack.c.bf16 %v997, %v997
    %v1000 = vrot.slane %v998, 1
    %v1002 = vsel %vm201, %v1000, 0
    %1004 = vmatprep.subr.bf16.mxu0 0
    %1005 = vmatpush1.bf16.msra.mxu0 %v193
    %1006 = vmatprep.subr.bf16.mxu0 0
    %1007 = vmatpush1.bf16.msra.mxu0 %v194
    %1008 = vmatprep.subr.bf16.mxu0 0
    %1009 = vmatpush1.bf16.msra.mxu0 %v195
    %1010 = vmatprep.subr.bf16.mxu0 0
    %1011 = vmatpush1.bf16.msra.mxu0 %v196
    %1012 = vmatprep.subr.bf16.mxu0 0
    %1013 = vmatpush1.bf16.msra.mxu0 0
    %1014 = vmatprep.subr.bf16.mxu0 0
    %1015 = vmatpush1.bf16.msra.mxu0 0
    %1016 = vmatprep.subr.bf16.mxu0 0
    %1017 = vmatpush1.bf16.msra.mxu0 0
    %1018 = vmatprep.subr.bf16.mxu0 0
    %1019 = vmatpush1.bf16.msra.mxu0 0
    %1020 = vmatprep.subr.bf16.mxu0 0
    %1021 = vmatpush1.bf16.msra.mxu0 0
    %1022 = vmatprep.subr.bf16.mxu0 0
    %1023 = vmatpush1.bf16.msra.mxu0 0
    %1024 = vmatprep.subr.bf16.mxu0 0
    %1025 = vmatpush1.bf16.msra.mxu0 0
    %1026 = vmatprep.subr.bf16.mxu0 0
    %1027 = vmatpush1.bf16.msra.mxu0 0
    %1028 = vmatprep.subr.bf16.mxu0 0
    %1029 = vmatpush1.bf16.msra.mxu0 0
    %1030 = vmatprep.subr.bf16.mxu0 0
    %1031 = vmatpush1.bf16.msra.mxu0 0
    %1032 = vmatprep.subr.bf16.mxu0 0
    %1033 = vmatpush1.bf16.msra.mxu0 0
    %1034 = vmatprep.subr.bf16.mxu0 0
    %1035 = vmatpush1.bf16.msra.mxu0 0
    %1036 = vmatprep.mubr.bf16.mxu0 0
    %1037 = vmatmul.mubr.bf16.gmra.mrb[0].mxu0 %v1002
    %v1038 = vpop.f32.mrb[0].mxu0
    %v1039 = vadd.f32 %v144, %v1038
    %v1040 = vpop.f32.mrb[0].mxu0
    %v1041 = vpop.f32.mrb[0].mxu0
    %v1042 = vpop.f32.mrb[0].mxu0
    %1043 = vdwg.mxu0
    %v1044 = vxor.u32 %v1039, 2147483648
    %v1045 = vmul.f32 %v1044, 1.442695
    %v1046 = vpow.pop %v1045
    %v1047 = vadd.f32 %v1046, 1.0
    %v1048 = vrcp.pop %v1047
    %v1049 = vmul.f32 1.0, %v1048
    %v1050 = vtanh.pop %v1039
    %v1051 = vmul.f32 %v1049, %v903
    %1053 = vrot.lane.b32.xlu0 %v1050, 64
    %v1054 = vpop.permute.xlu0 %1053
    %v1056 = vmul.f32 %v1049, %v1054
    %1058 = vrot.lane.b32.xlu0 %v1056, 32
    %v1059 = vpop.permute.xlu0 %1058
    %v1061 = vadd.f32 %v1051, %v1059
    %v1062 = vtanh.pop %v1061
    %1064 = vrot.lane.b32.xlu0 %v1062, 64
    %v1065 = vpop.permute.xlu0 %1064
    %v1067 = vmul.f32 %v1049, %v1065
    %v1068 = vpack.c.bf16 %v987, %v987
    %v1070 = vrot.slane %v1068, 1
    %1071 = vrot.lane.b32.xlu0 %v1070, 32
    %v1072 = vpop.permute.xlu0 %1071
    %v1074 = vsel %vm174, %v1072, 0
    %1076 = vmatprep.subr.bf16.mxu0 0
    %1077 = vmatpush1.bf16.msra.mxu0 %v281
    %1078 = vmatprep.subr.bf16.mxu0 0
    %1079 = vmatpush1.bf16.msra.mxu0 %v282
    %1080 = vmatprep.subr.bf16.mxu0 0
    %1081 = vmatpush1.bf16.msra.mxu0 0
    %1082 = vmatprep.subr.bf16.mxu0 0
    %1083 = vmatpush1.bf16.msra.mxu0 0
    %1084 = vmatprep.subr.bf16.mxu0 0
    %1085 = vmatpush1.bf16.msra.mxu0 0
    %1086 = vmatprep.subr.bf16.mxu0 0
    %1087 = vmatpush1.bf16.msra.mxu0 0
    %1088 = vmatprep.subr.bf16.mxu0 0
    %1089 = vmatpush1.bf16.msra.mxu0 0
    %1090 = vmatprep.subr.bf16.mxu0 0
    %1091 = vmatpush1.bf16.msra.mxu0 0
    %1092 = vmatprep.subr.bf16.mxu0 0
    %1093 = vmatpush1.bf16.msra.mxu0 0
    %1094 = vmatprep.subr.bf16.mxu0 0
    %1095 = vmatpush1.bf16.msra.mxu0 0
    %1096 = vmatprep.subr.bf16.mxu0 0
    %1097 = vmatpush1.bf16.msra.mxu0 0
    %1098 = vmatprep.subr.bf16.mxu0 0
    %1099 = vmatpush1.bf16.msra.mxu0 0
    %1100 = vmatprep.subr.bf16.mxu0 0
    %1101 = vmatpush1.bf16.msra.mxu0 0
    %1102 = vmatprep.subr.bf16.mxu0 0
    %1103 = vmatpush1.bf16.msra.mxu0 0
    %1104 = vmatprep.subr.bf16.mxu0 0
    %1105 = vmatpush1.bf16.msra.mxu0 0
    %1106 = vmatprep.subr.bf16.mxu0 0
    %1107 = vmatpush1.bf16.msra.mxu0 0
    %1108 = vmatprep.mubr.bf16.mxu0 0
    %1109 = vmatmul.mubr.bf16.gmra.mrb[0].mxu0 %v1074
    %v1110 = vpop.f32.mrb[0].mxu0
    %v1111 = vadd.f32 0.0, %v1110
    %v1112 = vpop.f32.mrb[0].mxu0
    %v1113 = vpop.f32.mrb[0].mxu0
    %v1114 = vpop.f32.mrb[0].mxu0
    %1115 = vdwg.mxu0
    %v1117 = vrot.slane %v1111, 4
    %v1119 = vadd.f32 %v124, %v1117
    %v1120 = vxor.u32 %v1119, 2147483648
    %v1121 = vmul.f32 %v1120, 1.442695
    %v1122 = vpow.pop %v1121
    %v1123 = vadd.f32 %v1122, 1.0
    %v1124 = vrcp.pop %v1123
    %v1125 = vmul.f32 1.0, %v1124
    %v1126 = vtanh.pop %v1119
    %v1128 = vrot.slane %v981, 6
    %v1130 = vmul.f32 %v1125, %v1128
    %1132 = vrot.lane.b32.xlu0 %v1126, 64
    %v1133 = vpop.permute.xlu0 %1132
    %v1135 = vmul.f32 %v1125, %v1133
    %1137 = vrot.lane.b32.xlu0 %v1135, 32
    %v1138 = vpop.permute.xlu0 %1137
    %v1140 = vadd.f32 %v1130, %v1138
    %v1141 = vtanh.pop %v1140
    %1143 = vrot.lane.b32.xlu0 %v1141, 64
    %v1144 = vpop.permute.xlu0 %1143
    %v1146 = vmul.f32 %v1125, %v1144
    %1148 = vrot.lane.b32.xlu0 %v1146, 32
    %v1149 = vpop.permute.xlu0 %1148
    %v1152 = vrot.slane %v1067, 4
    %1153 = vrot.lane.b32.xlu0 %v1152, 64
    %v1154 = vpop.permute.xlu0 %1153
    %v1156 = vsel %vm174, %v1149, %v1154
    %v1157 = vpack.c.bf16 %v1156, %v1156
    %v1159 = vrot.slane %v1157, 2
    %v1161 = vsel %vm201, %v1159, 0
    %1163 = vmatprep.subr.bf16.mxu0 0
    %1164 = vmatpush1.bf16.msra.mxu0 %v193
    %1165 = vmatprep.subr.bf16.mxu0 0
    %1166 = vmatpush1.bf16.msra.mxu0 %v194
    %1167 = vmatprep.subr.bf16.mxu0 0
    %1168 = vmatpush1.bf16.msra.mxu0 %v195
    %1169 = vmatprep.subr.bf16.mxu0 0
    %1170 = vmatpush1.bf16.msra.mxu0 %v196
    %1171 = vmatprep.subr.bf16.mxu0 0
    %1172 = vmatpush1.bf16.msra.mxu0 0
    %1173 = vmatprep.subr.bf16.mxu0 0
    %1174 = vmatpush1.bf16.msra.mxu0 0
    %1175 = vmatprep.subr.bf16.mxu0 0
    %1176 = vmatpush1.bf16.msra.mxu0 0
    %1177 = vmatprep.subr.bf16.mxu0 0
    %1178 = vmatpush1.bf16.msra.mxu0 0
    %1179 = vmatprep.subr.bf16.mxu0 0
    %1180 = vmatpush1.bf16.msra.mxu0 0
    %1181 = vmatprep.subr.bf16.mxu0 0
    %1182 = vmatpush1.bf16.msra.mxu0 0
    %1183 = vmatprep.subr.bf16.mxu0 0
    %1184 = vmatpush1.bf16.msra.mxu0 0
    %1185 = vmatprep.subr.bf16.mxu0 0
    %1186 = vmatpush1.bf16.msra.mxu0 0
    %1187 = vmatprep.subr.bf16.mxu0 0
    %1188 = vmatpush1.bf16.msra.mxu0 0
    %1189 = vmatprep.subr.bf16.mxu0 0
    %1190 = vmatpush1.bf16.msra.mxu0 0
    %1191 = vmatprep.subr.bf16.mxu0 0
    %1192 = vmatpush1.bf16.msra.mxu0 0
    %1193 = vmatprep.subr.bf16.mxu0 0
    %1194 = vmatpush1.bf16.msra.mxu0 0
    %1195 = vmatprep.mubr.bf16.mxu0 0
    %1196 = vmatmul.mubr.bf16.gmra.mrb[0].mxu0 %v1161
    %v1197 = vpop.f32.mrb[0].mxu0
    %v1198 = vadd.f32 %v144, %v1197
    %v1199 = vpop.f32.mrb[0].mxu0
    %v1200 = vpop.f32.mrb[0].mxu0
    %v1201 = vpop.f32.mrb[0].mxu0
    %1202 = vdwg.mxu0
    %v1203 = vxor.u32 %v1198, 2147483648
    %v1204 = vmul.f32 %v1203, 1.442695
    %v1205 = vpow.pop %v1204
    %v1206 = vadd.f32 %v1205, 1.0
    %v1207 = vrcp.pop %v1206
    %v1208 = vmul.f32 1.0, %v1207
    %v1209 = vtanh.pop %v1198
    %v1210 = vmul.f32 %v1208, %v1061
    %1212 = vrot.lane.b32.xlu0 %v1209, 64
    %v1213 = vpop.permute.xlu0 %1212
    %v1215 = vmul.f32 %v1208, %v1213
    %1217 = vrot.lane.b32.xlu0 %v1215, 32
    %v1218 = vpop.permute.xlu0 %1217
    %v1220 = vadd.f32 %v1210, %v1218
    %v1221 = vtanh.pop %v1220
    %1223 = vrot.lane.b32.xlu0 %v1221, 64
    %v1224 = vpop.permute.xlu0 %1223
    %v1226 = vmul.f32 %v1208, %v1224
    %v1227 = vpack.c.bf16 %v1146, %v1146
    %v1229 = vrot.slane %v1227, 2
    %1230 = vrot.lane.b32.xlu0 %v1229, 32
    %v1231 = vpop.permute.xlu0 %1230
    %v1233 = vsel %vm174, %v1231, 0
    %1235 = vmatprep.subr.bf16.mxu0 0
    %1236 = vmatpush1.bf16.msra.mxu0 %v281
    %1237 = vmatprep.subr.bf16.mxu0 0
    %1238 = vmatpush1.bf16.msra.mxu0 %v282
    %1239 = vmatprep.subr.bf16.mxu0 0
    %1240 = vmatpush1.bf16.msra.mxu0 0
    %1241 = vmatprep.subr.bf16.mxu0 0
    %1242 = vmatpush1.bf16.msra.mxu0 0
    %1243 = vmatprep.subr.bf16.mxu0 0
    %1244 = vmatpush1.bf16.msra.mxu0 0
    %1245 = vmatprep.subr.bf16.mxu0 0
    %1246 = vmatpush1.bf16.msra.mxu0 0
    %1247 = vmatprep.subr.bf16.mxu0 0
    %1248 = vmatpush1.bf16.msra.mxu0 0
    %1249 = vmatprep.subr.bf16.mxu0 0
    %1250 = vmatpush1.bf16.msra.mxu0 0
    %1251 = vmatprep.subr.bf16.mxu0 0
    %1252 = vmatpush1.bf16.msra.mxu0 0
    %1253 = vmatprep.subr.bf16.mxu0 0
    %1254 = vmatpush1.bf16.msra.mxu0 0
    %1255 = vmatprep.subr.bf16.mxu0 0
    %1256 = vmatpush1.bf16.msra.mxu0 0
    %1257 = vmatprep.subr.bf16.mxu0 0
    %1258 = vmatpush1.bf16.msra.mxu0 0
    %1259 = vmatprep.subr.bf16.mxu0 0
    %1260 = vmatpush1.bf16.msra.mxu0 0
    %1261 = vmatprep.subr.bf16.mxu0 0
    %1262 = vmatpush1.bf16.msra.mxu0 0
    %1263 = vmatprep.subr.bf16.mxu0 0
    %1264 = vmatpush1.bf16.msra.mxu0 0
    %1265 = vmatprep.subr.bf16.mxu0 0
    %1266 = vmatpush1.bf16.msra.mxu0 0
    %1267 = vmatprep.mubr.bf16.mxu0 0
    %1268 = vmatmul.mubr.bf16.gmra.mrb[0].mxu0 %v1233
    %v1269 = vpop.f32.mrb[0].mxu0
    %v1270 = vadd.f32 0.0, %v1269
    %v1271 = vpop.f32.mrb[0].mxu0
    %v1272 = vpop.f32.mrb[0].mxu0
    %v1273 = vpop.f32.mrb[0].mxu0
    %1274 = vdwg.mxu0
    %v1276 = vrot.slane %v1270, 2
    %v1278 = vadd.f32 %v124, %v1276
    %v1279 = vxor.u32 %v1278, 2147483648
    %v1280 = vmul.f32 %v1279, 1.442695
    %v1281 = vpow.pop %v1280
    %v1282 = vadd.f32 %v1281, 1.0
    %v1283 = vrcp.pop %v1282
    %v1284 = vmul.f32 1.0, %v1283
    %v1285 = vtanh.pop %v1278
    %v1287 = vrot.slane %v1140, 6
    %v1289 = vmul.f32 %v1284, %v1287
    %1291 = vrot.lane.b32.xlu0 %v1285, 64
    %v1292 = vpop.permute.xlu0 %1291
    %v1294 = vmul.f32 %v1284, %v1292
    %1296 = vrot.lane.b32.xlu0 %v1294, 32
    %v1297 = vpop.permute.xlu0 %1296
    %v1299 = vadd.f32 %v1289, %v1297
    %v1300 = vtanh.pop %v1299
    %1302 = vrot.lane.b32.xlu0 %v1300, 64
    %v1303 = vpop.permute.xlu0 %1302
    %v1305 = vmul.f32 %v1284, %v1303
    %1307 = vrot.lane.b32.xlu0 %v1305, 32
    %v1308 = vpop.permute.xlu0 %1307
    %v1311 = vrot.slane %v1226, 2
    %1312 = vrot.lane.b32.xlu0 %v1311, 64
    %v1313 = vpop.permute.xlu0 %1312
    %v1315 = vsel %vm174, %v1308, %v1313
    %v1316 = vpack.c.bf16 %v1315, %v1315
    %v1318 = vrot.slane %v1316, 3
    %v1320 = vsel %vm201, %v1318, 0
    %1322 = vmatprep.subr.bf16.mxu0 0
    %1323 = vmatpush1.bf16.msra.mxu0 %v193
    %1324 = vmatprep.subr.bf16.mxu0 0
    %1325 = vmatpush1.bf16.msra.mxu0 %v194
    %1326 = vmatprep.subr.bf16.mxu0 0
    %1327 = vmatpush1.bf16.msra.mxu0 %v195
    %1328 = vmatprep.subr.bf16.mxu0 0
    %1329 = vmatpush1.bf16.msra.mxu0 %v196
    %1330 = vmatprep.subr.bf16.mxu0 0
    %1331 = vmatpush1.bf16.msra.mxu0 0
    %1332 = vmatprep.subr.bf16.mxu0 0
    %1333 = vmatpush1.bf16.msra.mxu0 0
    %1334 = vmatprep.subr.bf16.mxu0 0
    %1335 = vmatpush1.bf16.msra.mxu0 0
    %1336 = vmatprep.subr.bf16.mxu0 0
    %1337 = vmatpush1.bf16.msra.mxu0 0
    %1338 = vmatprep.subr.bf16.mxu0 0
    %1339 = vmatpush1.bf16.msra.mxu0 0
    %1340 = vmatprep.subr.bf16.mxu0 0
    %1341 = vmatpush1.bf16.msra.mxu0 0
    %1342 = vmatprep.subr.bf16.mxu0 0
    %1343 = vmatpush1.bf16.msra.mxu0 0
    %1344 = vmatprep.subr.bf16.mxu0 0
    %1345 = vmatpush1.bf16.msra.mxu0 0
    %1346 = vmatprep.subr.bf16.mxu0 0
    %1347 = vmatpush1.bf16.msra.mxu0 0
    %1348 = vmatprep.subr.bf16.mxu0 0
    %1349 = vmatpush1.bf16.msra.mxu0 0
    %1350 = vmatprep.subr.bf16.mxu0 0
    %1351 = vmatpush1.bf16.msra.mxu0 0
    %1352 = vmatprep.subr.bf16.mxu0 0
    %1353 = vmatpush1.bf16.msra.mxu0 0
    %1354 = vmatprep.mubr.bf16.mxu0 0
    %1355 = vmatmul.mubr.bf16.gmra.mrb[0].mxu0 %v1320
    %v1356 = vpop.f32.mrb[0].mxu0
    %v1357 = vadd.f32 %v144, %v1356
    %v1358 = vpop.f32.mrb[0].mxu0
    %v1359 = vpop.f32.mrb[0].mxu0
    %v1360 = vpop.f32.mrb[0].mxu0
    %1361 = vdwg.mxu0
    %v1362 = vxor.u32 %v1357, 2147483648
    %v1363 = vmul.f32 %v1362, 1.442695
    %v1364 = vpow.pop %v1363
    %v1365 = vadd.f32 %v1364, 1.0
    %v1366 = vrcp.pop %v1365
    %v1367 = vmul.f32 1.0, %v1366
    %v1368 = vtanh.pop %v1357
    %v1369 = vmul.f32 %v1367, %v1220
    %1371 = vrot.lane.b32.xlu0 %v1368, 64
    %v1372 = vpop.permute.xlu0 %1371
    %v1374 = vmul.f32 %v1367, %v1372
    %1376 = vrot.lane.b32.xlu0 %v1374, 32
    %v1377 = vpop.permute.xlu0 %1376
    %v1379 = vadd.f32 %v1369, %v1377
    %v1380 = vtanh.pop %v1379
    %1382 = vrot.lane.b32.xlu0 %v1380, 64
    %v1383 = vpop.permute.xlu0 %1382
    %v1385 = vmul.f32 %v1367, %v1383
    %v1386 = vld [vmem:[%s6] sm:$0xff]
    %v1387 = vld [vmem:[%s6 + $0x8] sm:$0xff]
    %v1388 = vld [vmem:[%s6 + $0x10] sm:$0xff]
    %v1389 = vld [vmem:[%s6 + $0x18] sm:$0xff]
    %v1390 = vld [vmem:[%s7] sm:$0x1]
    %v1392 = vlaneseq
    %v1393 = vshrl.u32 %v1392, 7
    %v1394 = vsub.s32 0, %v1393
    %v1395 = vrot.slane %v1390, %v1394
    %1398 = vrot.lane.b32.xlu0 %v1385, 32
    %v1399 = vpop.permute.xlu0 %1398
    %v1400 = vsel %vm174, %v1399, 0
    %1402 = vmatprep.subr.mxu0 0.0
    %1403 = vmatpush1.msra.mxu0 %v1386
    %1404 = vmatprep.subr.mxu0 0.0
    %1405 = vmatpush1.msra.mxu0 %v1387
    %1406 = vmatprep.subr.mxu0 0.0
    %1407 = vmatpush1.msra.mxu0 %v1388
    %1408 = vmatprep.subr.mxu0 0.0
    %1409 = vmatpush1.msra.mxu0 %v1389
    %1410 = vmatprep.subr.mxu0 0.0
    %1411 = vmatpush1.msra.mxu0 0.0
    %1412 = vmatprep.subr.mxu0 0.0
    %1413 = vmatpush1.msra.mxu0 0.0
    %1414 = vmatprep.subr.mxu0 0.0
    %1415 = vmatpush1.msra.mxu0 0.0
    %1416 = vmatprep.subr.mxu0 0.0
    %1417 = vmatpush1.msra.mxu0 0.0
    %1418 = vmatprep.subr.mxu0 0.0
    %1419 = vmatpush1.msra.mxu0 0.0
    %1420 = vmatprep.subr.mxu0 0.0
    %1421 = vmatpush1.msra.mxu0 0.0
    %1422 = vmatprep.subr.mxu0 0.0
    %1423 = vmatpush1.msra.mxu0 0.0
    %1424 = vmatprep.subr.mxu0 0.0
    %1425 = vmatpush1.msra.mxu0 0.0
    %1426 = vmatprep.subr.mxu0 0.0
    %1427 = vmatpush1.msra.mxu0 0.0
    %1428 = vmatprep.subr.mxu0 0.0
    %1429 = vmatpush1.msra.mxu0 0.0
    %1430 = vmatprep.subr.mxu0 0.0
    %1431 = vmatpush1.msra.mxu0 0.0
    %1432 = vmatprep.subr.mxu0 0.0
    %1433 = vmatpush1.msra.mxu0 0.0
    %1434 = vmatprep.subr.mxu0 0.0
    %1435 = vmatpush1.msra.mxu0 0.0
    %1436 = vmatprep.subr.mxu0 0.0
    %1437 = vmatpush1.msra.mxu0 0.0
    %1438 = vmatprep.subr.mxu0 0.0
    %1439 = vmatpush1.msra.mxu0 0.0
    %1440 = vmatprep.subr.mxu0 0.0
    %1441 = vmatpush1.msra.mxu0 0.0
    %1442 = vmatprep.subr.mxu0 0.0
    %1443 = vmatpush1.msra.mxu0 0.0
    %1444 = vmatprep.subr.mxu0 0.0
    %1445 = vmatpush1.msra.mxu0 0.0
    %1446 = vmatprep.subr.mxu0 0.0
    %1447 = vmatpush1.msra.mxu0 0.0
    %1448 = vmatprep.subr.mxu0 0.0
    %1449 = vmatpush1.msra.mxu0 0.0
    %1450 = vmatprep.subr.mxu0 0.0
    %1451 = vmatpush1.msra.mxu0 0.0
    %1452 = vmatprep.subr.mxu0 0.0
    %1453 = vmatpush1.msra.mxu0 0.0
    %1454 = vmatprep.subr.mxu0 0.0
    %1455 = vmatpush1.msra.mxu0 0.0
    %1456 = vmatprep.subr.mxu0 0.0
    %1457 = vmatpush1.msra.mxu0 0.0
    %1458 = vmatprep.subr.mxu0 0.0
    %1459 = vmatpush1.msra.mxu0 0.0
    %1460 = vmatprep.subr.mxu0 0.0
    %1461 = vmatpush1.msra.mxu0 0.0
    %1462 = vmatprep.subr.mxu0 0.0
    %1463 = vmatpush1.msra.mxu0 0.0
    %1464 = vmatprep.subr.mxu0 0.0
    %1465 = vmatpush1.msra.mxu0 0.0
    %1466 = vmatprep.mubr.f32.mxu0 0.0
    %1467 = vmatmul.mubr.f32.gmra.mrb[0].mxu0 %v1400
    %v1468 = vpop.f32.mrb[0].mxu0
    %v1469 = vadd.f32 %v1395, %v1468
    %v1470 = vpop.f32.mrb[0].mxu0
    %1471 = vdwg.mxu0
    %v1472 = vmax.f32 %v1469, 0.0
    %v1473 = vld [vmem:[%s8] sm:$0xff]
    %v1474 = vld [vmem:[%s8 + $0x8] sm:$0xff]
    %v1475 = vld [vmem:[%s8 + $0x10] sm:$0xff]
    %v1476 = vld [vmem:[%s8 + $0x18] sm:$0xff]
    %v1477 = vld [vmem:[%s9] sm:$0x1]
    %v1479 = vlaneseq
    %v1480 = vshrl.u32 %v1479, 7
    %v1481 = vsub.s32 0, %v1480
    %v1482 = vrot.slane %v1477, %v1481
    %v1485 = vsel %vm174, %v1472, 0
    %1487 = vmatprep.subr.mxu0 0.0
    %1488 = vmatpush1.msra.mxu0 %v1473
    %1489 = vmatprep.subr.mxu0 0.0
    %1490 = vmatpush1.msra.mxu0 %v1474
    %1491 = vmatprep.subr.mxu0 0.0
    %1492 = vmatpush1.msra.mxu0 %v1475
    %1493 = vmatprep.subr.mxu0 0.0
    %1494 = vmatpush1.msra.mxu0 %v1476
    %1495 = vmatprep.subr.mxu0 0.0
    %1496 = vmatpush1.msra.mxu0 0.0
    %1497 = vmatprep.subr.mxu0 0.0
    %1498 = vmatpush1.msra.mxu0 0.0
    %1499 = vmatprep.subr.mxu0 0.0
    %1500 = vmatpush1.msra.mxu0 0.0
    %1501 = vmatprep.subr.mxu0 0.0
    %1502 = vmatpush1.msra.mxu0 0.0
    %1503 = vmatprep.subr.mxu0 0.0
    %1504 = vmatpush1.msra.mxu0 0.0
    %1505 = vmatprep.subr.mxu0 0.0
    %1506 = vmatpush1.msra.mxu0 0.0
    %1507 = vmatprep.subr.mxu0 0.0
    %1508 = vmatpush1.msra.mxu0 0.0
    %1509 = vmatprep.subr.mxu0 0.0
    %1510 = vmatpush1.msra.mxu0 0.0
    %1511 = vmatprep.subr.mxu0 0.0
    %1512 = vmatpush1.msra.mxu0 0.0
    %1513 = vmatprep.subr.mxu0 0.0
    %1514 = vmatpush1.msra.mxu0 0.0
    %1515 = vmatprep.subr.mxu0 0.0
    %1516 = vmatpush1.msra.mxu0 0.0
    %1517 = vmatprep.subr.mxu0 0.0
    %1518 = vmatpush1.msra.mxu0 0.0
    %1519 = vmatprep.subr.mxu0 0.0
    %1520 = vmatpush1.msra.mxu0 0.0
    %1521 = vmatprep.subr.mxu0 0.0
    %1522 = vmatpush1.msra.mxu0 0.0
    %1523 = vmatprep.subr.mxu0 0.0
    %1524 = vmatpush1.msra.mxu0 0.0
    %1525 = vmatprep.subr.mxu0 0.0
    %1526 = vmatpush1.msra.mxu0 0.0
    %1527 = vmatprep.subr.mxu0 0.0
    %1528 = vmatpush1.msra.mxu0 0.0
    %1529 = vmatprep.subr.mxu0 0.0
    %1530 = vmatpush1.msra.mxu0 0.0
    %1531 = vmatprep.subr.mxu0 0.0
    %1532 = vmatpush1.msra.mxu0 0.0
    %1533 = vmatprep.subr.mxu0 0.0
    %1534 = vmatpush1.msra.mxu0 0.0
    %1535 = vmatprep.subr.mxu0 0.0
    %1536 = vmatpush1.msra.mxu0 0.0
    %1537 = vmatprep.subr.mxu0 0.0
    %1538 = vmatpush1.msra.mxu0 0.0
    %1539 = vmatprep.subr.mxu0 0.0
    %1540 = vmatpush1.msra.mxu0 0.0
    %1541 = vmatprep.subr.mxu0 0.0
    %1542 = vmatpush1.msra.mxu0 0.0
    %1543 = vmatprep.subr.mxu0 0.0
    %1544 = vmatpush1.msra.mxu0 0.0
    %1545 = vmatprep.subr.mxu0 0.0
    %1546 = vmatpush1.msra.mxu0 0.0
    %1547 = vmatprep.subr.mxu0 0.0
    %1548 = vmatpush1.msra.mxu0 0.0
    %1549 = vmatprep.subr.mxu0 0.0
    %1550 = vmatpush1.msra.mxu0 0.0
    %1551 = vmatprep.mubr.f32.mxu0 0.0
    %1552 = vmatmul.mubr.f32.gmra.mrb[0].mxu0 %v1485
    %v1553 = vpop.f32.mrb[0].mxu0
    %v1554 = vadd.f32 %v1482, %v1553
    %v1555 = vpop.f32.mrb[0].mxu0
    %1556 = vdwg.mxu0
    %vm1557 = vcmask 25600
    %1558 = vst.msk [vmem:[#allocation7] sm:$0x3] %vm1557, %v1554
    // Predicated region
    $region50: #{tpu_custom_call.1} parent=1 // pred_check
      _
    $region51: #{tpu_custom_call.1} parent=1 // pred_check_branch
      %1560 = sbr.rel (0) target = $region53
    $region52: #{tpu_custom_call.1} parent=1 // pred_region
      %s1562 = ssub.s32 32, 32
      %1563 = vsyncadd [#allocation4], %s1562
      %s1565 = sshll.u32 [#allocation7], 4
      %s1566 = int_to_ptr.vmem [resolvable:$true] %s1565
      %1568 = dma.vmem_to_hbm [thread:$0]  %s1566, 32, %s10, [#allocation4]
    $region53: #{tpu_custom_call.1} parent=1 // pred_fallthru
      _
    // Predicated region
    $region54: #{tpu_custom_call.1} parent=1 // pred_check
      _
    $region55: #{tpu_custom_call.1} parent=1 // pred_check_branch
      %1570 = sbr.rel (0) target = $region57
    $region56: #{tpu_custom_call.1} parent=1 // pred_region
      %1571 = dma.done [#allocation4], 32
    $region57: #{tpu_custom_call.1} parent=1 // pred_fallthru
      _
    %1572 = vsyncpa [#allocation3], 1
    %1573 = vsyncpa [#allocation6], 1
    %1574 = vsyncpa [#allocation4], 1

</llo_original>
